<compile_context>
chip_gen: v6e
topology: v6e:2x2x1
jax: 0.10.0
libtpu: 0.0.40
codegen_flags: <defaults>
</compile_context>

<pallas_src>
import functools
import math

import jax
import jax.numpy as jnp
from jax import lax
from jax.experimental import pallas as pl
from jax.experimental.pallas import tpu as pltpu


_VMEM_LIMIT = 32 * 1024 * 1024   # safe on v5e/v6e (128 MiB phys) and v7x (64 MiB)
_LN_EPS = 1e-12
_MASK_FILL = -10000.0


def _tile(dim, target):
    """Largest tile <= target that divides dim (falls back to the full dim)."""
    if dim <= target:
        return dim
    t = target
    while t > 1 and dim % t:
        t //= 2
    return t if t >= 1 and dim % t == 0 else dim


# ----------------------------------------------------------------------------
# Pallas kernels
# ----------------------------------------------------------------------------

def _matmul_bias_kernel(x_ref, w_ref, b_ref, o_ref, acc_ref):
    """Tiled (M,K)@(K,N)+b with f32 accumulator over the K grid axis."""
    @pl.when(pl.program_id(2) == 0)
    def _():
        acc_ref[...] = jnp.zeros_like(acc_ref)

    acc_ref[...] += jnp.dot(x_ref[...], w_ref[...],
                            preferred_element_type=jnp.float32)

    @pl.when(pl.program_id(2) == pl.num_programs(2) - 1)
    def _():
        o_ref[...] = (acc_ref[...] + b_ref[...]).astype(o_ref.dtype)


def _matmul_res_ln_kernel(x_ref, w_ref, b_ref, r_ref, g_ref, beta_ref,
                          o_ref, acc_ref, *, eps):
    """Tiled GEMM with fused bias + residual-add + LayerNorm epilogue."""
    @pl.when(pl.program_id(1) == 0)
    def _():
        acc_ref[...] = jnp.zeros_like(acc_ref)

    acc_ref[...] += jnp.dot(x_ref[...], w_ref[...],
                            preferred_element_type=jnp.float32)

    @pl.when(pl.program_id(1) == pl.num_programs(1) - 1)
    def _():
        y = acc_ref[...] + b_ref[...] + r_ref[...].astype(jnp.float32)
        mean = jnp.mean(y, axis=-1, keepdims=True)
        var = jnp.mean(jnp.square(y - mean), axis=-1, keepdims=True)
        o_ref[...] = ((y - mean) * lax.rsqrt(var + eps) * g_ref[...]
                      + beta_ref[...]).astype(o_ref.dtype)


def _ffn_res_ln_kernel(x_ref, w1_ref, b1_ref, w2_ref, b2_ref, g_ref, beta_ref,
                       o_ref, *, eps):
    """Row-tiled FFN: linear -> ReLU -> linear, fused residual + LayerNorm."""
    x = x_ref[...]                                                # (tm, D) bf16
    h = jnp.dot(x, w1_ref[...], preferred_element_type=jnp.float32) + b1_ref[...]
    h = jnp.maximum(h, 0.0)
    y = jnp.dot(h.astype(w2_ref.dtype), w2_ref[...],
                preferred_element_type=jnp.float32) + b2_ref[...]
    y = y + x.astype(jnp.float32)                                 # residual
    mean = jnp.mean(y, axis=-1, keepdims=True)
    var = jnp.mean(jnp.square(y - mean), axis=-1, keepdims=True)
    o_ref[...] = ((y - mean) * lax.rsqrt(var + eps) * g_ref[...]
                  + beta_ref[...]).astype(o_ref.dtype)


def _attn_kernel(q_ref, k_ref, v_ref, mask_ref, o_ref, m_sc, l_sc, acc_sc, *,
                 scale):
    """Flash-style attention: all heads of one batch, online softmax over the
    KV grid axis; mask is loaded once per batch (shared across heads)."""
    kb = pl.program_id(1)

    @pl.when(kb == 0)
    def _():
        m_sc[...] = jnp.full_like(m_sc, -jnp.inf)
        l_sc[...] = jnp.zeros_like(l_sc)
        acc_sc[...] = jnp.zeros_like(acc_sc)

    q = q_ref[0]            # (H, Sq, Dh)  bf16
    k = k_ref[0]            # (H, Tk, Dh)  bf16
    v = v_ref[0]            # (H, Tk, Dh)  bf16
    mask = mask_ref[0]      # (Sq, Tk)     f32 (1 = keep, 0 = masked)

    # scores: contract the last (head-dim) axes -> no explicit k.T transpose.
    s = lax.dot_general(q, k, dimension_numbers=(((2,), (2,)), ((0,), (0,))),
                        preferred_element_type=jnp.float32) * scale
    s = jnp.where(mask[None, :, :] == 0.0, _MASK_FILL, s)

    m_new = jnp.maximum(m_sc[...], jnp.max(s, axis=-1, keepdims=True))
    alpha = jnp.exp(m_sc[...] - m_new)
    p = jnp.exp(s - m_new)
    l_sc[...] = alpha * l_sc[...] + jnp.sum(p, axis=-1, keepdims=True)
    pv = lax.dot_general(p.astype(v.dtype), v,
                         dimension_numbers=(((2,), (1,)), ((0,), (0,))),
                         preferred_element_type=jnp.float32)
    acc_sc[...] = alpha * acc_sc[...] + pv
    m_sc[...] = m_new

    @pl.when(kb == pl.num_programs(1) - 1)
    def _():
        o_ref[0] = (acc_sc[...] *
                    pl.reciprocal(l_sc[...], approx=True)).astype(o_ref.dtype)


# ----------------------------------------------------------------------------
# Pallas wrappers
# ----------------------------------------------------------------------------

def _linear(x, w, b, out_dtype=jnp.bfloat16, tm=256, tn=512, tk=512):
    M, K = x.shape
    N = w.shape[1]
    tm, tn, tk = _tile(M, tm), _tile(N, tn), _tile(K, tk)
    return pl.pallas_call(
        _matmul_bias_kernel,
        out_shape=jax.ShapeDtypeStruct((M, N), out_dtype),
        grid=(M // tm, N // tn, K // tk),
        in_specs=[
            pl.BlockSpec((tm, tk), lambda i, j, k: (i, k)),
            pl.BlockSpec((tk, tn), lambda i, j, k: (k, j)),
            pl.BlockSpec((1, tn), lambda i, j, k: (0, j)),
        ],
        out_specs=pl.BlockSpec((tm, tn), lambda i, j, k: (i, j)),
        scratch_shapes=[pltpu.VMEM((tm, tn), jnp.float32)],
        compiler_params=pltpu.CompilerParams(
            dimension_semantics=("parallel", "parallel", "arbitrary"),
            vmem_limit_bytes=_VMEM_LIMIT),
    )(x, w, b.reshape(1, N))


def _linear_res_ln(x, w, b, res, gamma, beta, out_dtype=jnp.bfloat16,
                   tm=256, tk=512):
    # N == model_dim stays untiled so the LayerNorm epilogue sees full rows.
    M, K = x.shape
    N = w.shape[1]
    tm, tk = _tile(M, tm), _tile(K, tk)
    return pl.pallas_call(
        functools.partial(_matmul_res_ln_kernel, eps=_LN_EPS),
        out_shape=jax.ShapeDtypeStruct((M, N), out_dtype),
        grid=(M // tm, K // tk),
        in_specs=[
            pl.BlockSpec((tm, tk), lambda i, k: (i, k)),
            pl.BlockSpec((tk, N), lambda i, k: (k, 0)),
            pl.BlockSpec((1, N), lambda i, k: (0, 0)),
            pl.BlockSpec((tm, N), lambda i, k: (i, 0)),
            pl.BlockSpec((1, N), lambda i, k: (0, 0)),
            pl.BlockSpec((1, N), lambda i, k: (0, 0)),
        ],
        out_specs=pl.BlockSpec((tm, N), lambda i, k: (i, 0)),
        scratch_shapes=[pltpu.VMEM((tm, N), jnp.float32)],
        compiler_params=pltpu.CompilerParams(
            dimension_semantics=("parallel", "arbitrary"),
            vmem_limit_bytes=_VMEM_LIMIT),
    )(x, w, b.reshape(1, N), res, gamma.reshape(1, N), beta.reshape(1, N))


def _ffn_res_ln(x, w1, b1, w2, b2, gamma, beta, out_dtype=jnp.bfloat16, tm=256):
    M, D = x.shape
    F = w1.shape[1]
    tm = _tile(M, tm)
    return pl.pallas_call(
        functools.partial(_ffn_res_ln_kernel, eps=_LN_EPS),
        out_shape=jax.ShapeDtypeStruct((M, D), out_dtype),
        grid=(M // tm,),
        in_specs=[
            pl.BlockSpec((tm, D), lambda i: (i, 0)),
            pl.BlockSpec((D, F), lambda i: (0, 0)),     # weights stay resident
            pl.BlockSpec((1, F), lambda i: (0, 0)),
            pl.BlockSpec((F, D), lambda i: (0, 0)),
            pl.BlockSpec((1, D), lambda i: (0, 0)),
            pl.BlockSpec((1, D), lambda i: (0, 0)),
            pl.BlockSpec((1, D), lambda i: (0, 0)),
        ],
        out_specs=pl.BlockSpec((tm, D), lambda i: (i, 0)),
        compiler_params=pltpu.CompilerParams(
            dimension_semantics=("parallel",),
            vmem_limit_bytes=_VMEM_LIMIT),
    )(x, w1, b1.reshape(1, F), w2, b2.reshape(1, D),
      gamma.reshape(1, D), beta.reshape(1, D))


def _attention(q, k, v, mask, tkv=512):
    # q: (B,H,Sq,Dh) bf16 ; k,v: (B,H,Sk,Dh) bf16 ; mask: (B,Sq,Sk) f32
    B, H, Sq, Dh = q.shape
    Sk = k.shape[2]
    tkv = _tile(Sk, tkv)
    scale = 1.0 / math.sqrt(Dh)
    return pl.pallas_call(
        functools.partial(_attn_kernel, scale=scale),
        out_shape=jax.ShapeDtypeStruct((B, H, Sq, Dh), jnp.bfloat16),
        grid=(B, Sk // tkv),
        in_specs=[
            pl.BlockSpec((1, H, Sq, Dh), lambda b, kb: (b, 0, 0, 0)),
            pl.BlockSpec((1, H, tkv, Dh), lambda b, kb: (b, 0, kb, 0)),
            pl.BlockSpec((1, H, tkv, Dh), lambda b, kb: (b, 0, kb, 0)),
            pl.BlockSpec((1, Sq, tkv), lambda b, kb: (b, 0, kb)),
        ],
        out_specs=pl.BlockSpec((1, H, Sq, Dh), lambda b, kb: (b, 0, 0, 0)),
        scratch_shapes=[
            pltpu.VMEM((H, Sq, 1), jnp.float32),    # running max
            pltpu.VMEM((H, Sq, 1), jnp.float32),    # running denom
            pltpu.VMEM((H, Sq, Dh), jnp.float32),   # running numerator
        ],
        compiler_params=pltpu.CompilerParams(
            dimension_semantics=("parallel", "arbitrary"),
            vmem_limit_bytes=_VMEM_LIMIT),
    )(q, k, v, mask)


# ----------------------------------------------------------------------------
# Model glue (head split/merge, layer stacking)
# ----------------------------------------------------------------------------

def _split_heads(x, num_heads):
    B, S, D = x.shape
    Dh = D // num_heads
    return x.reshape(B, S, num_heads, Dh).transpose(0, 2, 1, 3)


def _merge_heads(x):
    B, H, S, Dh = x.shape
    return x.transpose(0, 2, 1, 3).reshape(B, S, H * Dh)


def _self_attention_block(x, mask, lp, num_heads):
    B, S, D = x.shape
    x2d = x.reshape(B * S, D)
    # fused Q/K/V projection: one GEMM, one activation read
    qkv = _linear(x2d, lp["self_wqkv"], lp["self_bqkv"]).reshape(B, S, 3 * D)
    q = _split_heads(qkv[..., :D], num_heads)
    k = _split_heads(qkv[..., D:2 * D], num_heads)
    v = _split_heads(qkv[..., 2 * D:], num_heads)
    ctx = _merge_heads(_attention(q, k, v, mask)).reshape(B * S, D)
    # output projection with fused residual-add + LayerNorm epilogue
    out = _linear_res_ln(ctx, lp["self_wo"], lp["self_bo"], x2d,
                         lp["ln1_g"], lp["ln1_b"])
    return out.reshape(B, S, D)


def _cross_attention_block(x, enc, mask, lp, num_heads):
    B, Sq, D = x.shape
    Sk = enc.shape[1]
    x2d = x.reshape(B * Sq, D)
    q = _split_heads(
        _linear(x2d, lp["cross_wq"], lp["cross_bq"]).reshape(B, Sq, D),
        num_heads)
    # fused K/V projection of the encoder output
    kv = _linear(enc.reshape(B * Sk, D), lp["cross_wkv"],
                 lp["cross_bkv"]).reshape(B, Sk, 2 * D)
    k = _split_heads(kv[..., :D], num_heads)
    v = _split_heads(kv[..., D:], num_heads)
    ctx = _merge_heads(_attention(q, k, v, mask)).reshape(B * Sq, D)
    out = _linear_res_ln(ctx, lp["cross_wo"], lp["cross_bo"], x2d,
                         lp["ln2_g"], lp["ln2_b"])
    return out.reshape(B, Sq, D)


def _decoder_layer(x, enc, tgt_mask, src_mask, lp, num_heads):
    B, S, D = x.shape
    x = _self_attention_block(x, tgt_mask, lp, num_heads)
    x = _cross_attention_block(x, enc, src_mask, lp, num_heads)
    out2d = _ffn_res_ln(x.reshape(B * S, D), lp["ffn_w1"], lp["ffn_b1"],
                        lp["ffn_w2"], lp["ffn_b2"], lp["ln3_g"], lp["ln3_b"])
    return out2d.reshape(B, S, D)


@functools.partial(jax.jit, static_argnames=("num_heads",))
def decoder_forward(params, target_ids, encoder_src, target_mask, src_mask,
                    num_heads):
    B, S = target_ids.shape
    D = params["tok_emb"].shape[1]
    # TransformerEmbedding: token gather + sinusoidal PE (dropout = identity).
    # TODO(synk): embedding gather + PE add could move into a Pallas kernel
    # with scalar-prefetched token ids; kept as plain-JAX glue here.
    x = (params["tok_emb"][target_ids]
         + params["pos_enc"][:S][None, :, :]).astype(jnp.bfloat16)
    enc = encoder_src.astype(jnp.bfloat16)
    tmask = target_mask.astype(jnp.float32)
    smask = src_mask.astype(jnp.float32)
    for lp in params["layers"]:
        x = _decoder_layer(x, enc, tmask, smask, lp, num_heads)
    logits = _linear(x.reshape(B * S, D), params["out_w"], params["out_b"],
                     out_dtype=jnp.float32)
    return logits.reshape(B, S, -1)


# ----------------------------------------------------------------------------
# Deterministic parameter init (matmul weights stored in bf16)
# ----------------------------------------------------------------------------

def _sinusoidal_pe(max_len, d):
    pos = jnp.arange(max_len, dtype=jnp.float32)[:, None]
    i = jnp.arange(0, d, 2, dtype=jnp.float32)[None, :]
    angle = pos / jnp.power(10000.0, i / d)
    pe = jnp.zeros((max_len, d), jnp.float32)
    pe = pe.at[:, 0::2].set(jnp.sin(angle))
    pe = pe.at[:, 1::2].set(jnp.cos(angle))
    return pe


def init_params(key, vocab, max_len, d, ff, num_layers):
    keys = jax.random.split(key, 2 + num_layers)

    def dense(k, shape, scale=0.02):
        return (scale * jax.random.normal(k, shape, jnp.float32)).astype(
            jnp.bfloat16)

    params = {
        "tok_emb": jax.random.normal(keys[0], (vocab, d), jnp.float32),
        "pos_enc": _sinusoidal_pe(max_len, d),
        "out_w": dense(keys[1], (d, vocab)),
        "out_b": jnp.zeros((vocab,), jnp.float32),
        "layers": [],
    }
    for li in range(num_layers):
        lk = jax.random.split(keys[2 + li], 8)
        lp = {}
        # self-attention: fused QKV weight (D, 3D)
        wq, wk, wv = (dense(lk[j], (d, d)) for j in range(3))
        lp["self_wqkv"] = jnp.concatenate([wq, wk, wv], axis=1)
        lp["self_bqkv"] = jnp.zeros((3 * d,), jnp.float32)
        lp["self_wo"] = dense(lk[3], (d, d))
        lp["self_bo"] = jnp.zeros((d,), jnp.float32)
        # cross-attention: separate Q, fused KV weight (D, 2D)
        lp["cross_wq"] = dense(lk[4], (d, d))
        lp["cross_bq"] = jnp.zeros((d,), jnp.float32)
        ck = dense(jax.random.fold_in(lk[5], 0), (d, d))
        cv = dense(jax.random.fold_in(lk[5], 1), (d, d))
        lp["cross_wkv"] = jnp.concatenate([ck, cv], axis=1)
        lp["cross_bkv"] = jnp.zeros((2 * d,), jnp.float32)
        lp["cross_wo"] = dense(lk[6], (d, d))
        lp["cross_bo"] = jnp.zeros((d,), jnp.float32)
        # FFN
        f1, f2 = jax.random.split(lk[7])
        lp["ffn_w1"] = dense(f1, (d, ff))
        lp["ffn_b1"] = jnp.zeros((ff,), jnp.float32)
        lp["ffn_w2"] = dense(f2, (ff, d))
        lp["ffn_b2"] = jnp.zeros((d,), jnp.float32)
        # LayerNorms (kept in f32)
        for n in (1, 2, 3):
            lp[f"ln{n}_g"] = jnp.ones((d,), jnp.float32)
            lp[f"ln{n}_b"] = jnp.zeros((d,), jnp.float32)
        params["layers"].append(lp)
    return params


# ----------------------------------------------------------------------------
# Main
# ----------------------------------------------------------------------------

if __name__ == "__main__":
    B, S_TGT, S_SRC = 2, 8, 8
    VOCAB, MAX_LEN, D, FF, H, L = 64, 16, 32, 64, 4, 2

    key = jax.random.PRNGKey(0)
    k_param, k_tok, k_enc = jax.random.split(key, 3)

    params = init_params(k_param, VOCAB, MAX_LEN, D, FF, L)

    target = jax.random.randint(k_tok, (B, S_TGT), 0, VOCAB, dtype=jnp.int32)
    encoder_src = jax.random.normal(k_enc, (B, S_SRC, D), jnp.float32)
    # causal target mask (1 = attend, 0 = masked) and all-ones source mask
    target_mask = jnp.tile(
        jnp.tril(jnp.ones((S_TGT, S_TGT), jnp.float32))[None], (B, 1, 1))
    src_mask = jnp.ones((B, S_TGT, S_SRC), jnp.float32)

    out = decoder_forward(params, target, encoder_src, target_mask, src_mask, H)
    out = jax.block_until_ready(out)

    assert out.shape == (B, S_TGT, VOCAB)
    assert jnp.all(jnp.isfinite(out))
    print("KERNEL_OK")
</pallas_src>

<mosaic_0001>
module attributes {stable_mosaic.version = 11 : i64} {
  func.func @_matmul_bias_kernel(%arg0: i32, %arg1: i32, %arg2: i32, %arg3: memref<16x32xbf16, #tpu.memory_space<vmem>>, %arg4: memref<32x96xbf16, #tpu.memory_space<vmem>>, %arg5: memref<1x96xf32, #tpu.memory_space<vmem>>, %arg6: memref<16x96xbf16, #tpu.memory_space<vmem>>, %arg7: memref<16x96xf32, #tpu.memory_space<vmem>>) attributes {dimension_semantics = [#tpu.dimension_semantics<parallel>, #tpu.dimension_semantics<parallel>, #tpu.dimension_semantics<arbitrary>], iteration_bounds = array<i64: 1, 1, 1>, scalar_prefetch = 0 : i64, scratch_operands = 1 : i64, tpu.core_type = #tpu.core_type<tc>, window_params = [{transform_indices = @transform_0, window_bounds = array<i64: 16, 32>}, {transform_indices = @transform_1, window_bounds = array<i64: 32, 96>}, {transform_indices = @transform_2, window_bounds = array<i64: 1, 96>}, {transform_indices = @transform_3, window_bounds = array<i64: 16, 96>}]} {
    %c0_i32 = arith.constant 0 : i32
    %0 = arith.cmpi eq, %arg2, %c0_i32 : i32
    %1 = arith.extui %0 : i1 to i32
    %c0_i32_0 = arith.constant 0 : i32
    %2 = arith.cmpi ne, %1, %c0_i32_0 : i32
    scf.if %2 {
      %cst_10 = arith.constant 0.000000e+00 : f32
      %12 = vector.broadcast %cst_10 : f32 to vector<16x96xf32>
      %c0_11 = arith.constant 0 : index
      %c0_12 = arith.constant 0 : index
      %13 = vector.load %arg7[%c0_11, %c0_12] : memref<16x96xf32, #tpu.memory_space<vmem>>, vector<16x96xf32>
      tpu.vector_store %arg7[%c0_11, %c0_12], %12 {strides = array<i32>} : memref<16x96xf32, #tpu.memory_space<vmem>>, vector<16x96xf32>,
    } else {
    }
    %c0 = arith.constant 0 : index
    %c0_1 = arith.constant 0 : index
    %3 = vector.load %arg7[%c0, %c0_1] : memref<16x96xf32, #tpu.memory_space<vmem>>, vector<16x96xf32>
    %c0_2 = arith.constant 0 : index
    %c0_3 = arith.constant 0 : index
    %4 = vector.load %arg3[%c0_2, %c0_3] : memref<16x32xbf16, #tpu.memory_space<vmem>>, vector<16x32xbf16>
    %c0_4 = arith.constant 0 : index
    %c0_5 = arith.constant 0 : index
    %5 = vector.load %arg4[%c0_4, %c0_5] : memref<32x96xbf16, #tpu.memory_space<vmem>>, vector<32x96xbf16>
    %cst = arith.constant dense<0.000000e+00> : vector<16x96xf32>
    %6 = tpu.matmul %4, %5, %cst {dimension_numbers = #tpu.dot_dimension_numbers<[1], [0], [0], [1], [0, 0, 1, 1], [], []>} : vector<16x32xbf16>, vector<32x96xbf16>, vector<16x96xf32> -> vector<16x96xf32>
    %7 = arith.addf %3, %6 : vector<16x96xf32>
    %c0_6 = arith.constant 0 : index
    %c0_7 = arith.constant 0 : index
    %8 = vector.load %arg7[%c0_6, %c0_7] : memref<16x96xf32, #tpu.memory_space<vmem>>, vector<16x96xf32>
    tpu.vector_store %arg7[%c0_6, %c0_7], %7 {strides = array<i32>} : memref<16x96xf32, #tpu.memory_space<vmem>>, vector<16x96xf32>,
    %c0_i32_8 = arith.constant 0 : i32
    %9 = arith.cmpi eq, %arg2, %c0_i32_8 : i32
    %10 = arith.extui %9 : i1 to i32
    %c0_i32_9 = arith.constant 0 : i32
    %11 = arith.cmpi ne, %10, %c0_i32_9 : i32
    scf.if %11 {
      %c0_10 = arith.constant 0 : index
      %c0_11 = arith.constant 0 : index
      %12 = vector.load %arg7[%c0_10, %c0_11] : memref<16x96xf32, #tpu.memory_space<vmem>>, vector<16x96xf32>
      %c0_12 = arith.constant 0 : index
      %c0_13 = arith.constant 0 : index
      %13 = vector.load %arg5[%c0_12, %c0_13] : memref<1x96xf32, #tpu.memory_space<vmem>>, vector<1x96xf32>
      %14 = vector.broadcast %13 : vector<1x96xf32> to vector<16x96xf32>
      %15 = arith.addf %12, %14 : vector<16x96xf32>
      %16 = arith.truncf %15 : vector<16x96xf32> to vector<16x96xbf16>
      %c0_14 = arith.constant 0 : index
      %c0_15 = arith.constant 0 : index
      %17 = vector.load %arg6[%c0_14, %c0_15] : memref<16x96xbf16, #tpu.memory_space<vmem>>, vector<16x96xbf16>
      tpu.vector_store %arg6[%c0_14, %c0_15], %16 {strides = array<i32>} : memref<16x96xbf16, #tpu.memory_space<vmem>>, vector<16x96xbf16>,
    } else {
    }
    return
  }
  func.func @transform_0(%arg0: i32, %arg1: i32, %arg2: i32) -> (i32, i32) {
    %c0_i32 = arith.constant 0 : i32
    return %arg0, %arg2 : i32, i32
  }
  func.func @transform_1(%arg0: i32, %arg1: i32, %arg2: i32) -> (i32, i32) {
    %c0_i32 = arith.constant 0 : i32
    return %arg2, %arg1 : i32, i32
  }
  func.func @transform_2(%arg0: i32, %arg1: i32, %arg2: i32) -> (i32, i32) {
    %c0_i32 = arith.constant 0 : i32
    %c0_i32_0 = arith.constant 0 : i32
    return %c0_i32, %arg1 : i32, i32
  }
  func.func @transform_3(%arg0: i32, %arg1: i32, %arg2: i32) -> (i32, i32) {
    %c0_i32 = arith.constant 0 : i32
    return %arg0, %arg1 : i32, i32
  }
}

module attributes {stable_mosaic.version = 11 : i64} {
  func.func @_attn_kernel(%arg0: i32, %arg1: i32, %arg2: memref<1x4x8x8xbf16, #tpu.memory_space<vmem>>, %arg3: memref<1x4x8x8xbf16, #tpu.memory_space<vmem>>, %arg4: memref<1x4x8x8xbf16, #tpu.memory_space<vmem>>, %arg5: memref<1x8x8xf32, #tpu.memory_space<vmem>>, %arg6: memref<1x4x8x8xbf16, #tpu.memory_space<vmem>>, %arg7: memref<4x8x1xf32, #tpu.memory_space<vmem>>, %arg8: memref<4x8x1xf32, #tpu.memory_space<vmem>>, %arg9: memref<4x8x8xf32, #tpu.memory_space<vmem>>) attributes {dimension_semantics = [#tpu.dimension_semantics<parallel>, #tpu.dimension_semantics<arbitrary>], iteration_bounds = array<i64: 2, 1>, scalar_prefetch = 0 : i64, scratch_operands = 3 : i64, tpu.core_type = #tpu.core_type<tc>, window_params = [{transform_indices = @transform_0, window_bounds = array<i64: 1, 4, 8, 8>}, {transform_indices = @transform_1, window_bounds = array<i64: 1, 4, 8, 8>}, {transform_indices = @transform_2, window_bounds = array<i64: 1, 4, 8, 8>}, {transform_indices = @transform_3, window_bounds = array<i64: 1, 8, 8>}, {transform_indices = @transform_4, window_bounds = array<i64: 1, 4, 8, 8>}]} {
    %c0_i32 = arith.constant 0 : i32
    %0 = arith.cmpi eq, %arg1, %c0_i32 : i32
    %1 = arith.extui %0 : i1 to i32
    %c0_i32_0 = arith.constant 0 : i32
    %2 = arith.cmpi ne, %1, %c0_i32_0 : i32
    scf.if %2 {
      %cst_44 = arith.constant 0xFF800000 : f32
      %48 = vector.broadcast %cst_44 : f32 to vector<4x8x1xf32>
      %c0_45 = arith.constant 0 : index
      %c0_46 = arith.constant 0 : index
      %c0_47 = arith.constant 0 : index
      %49 = vector.load %arg7[%c0_45, %c0_46, %c0_47] : memref<4x8x1xf32, #tpu.memory_space<vmem>>, vector<4x8x1xf32>
      tpu.vector_store %arg7[%c0_45, %c0_46, %c0_47], %48 {strides = array<i32>} : memref<4x8x1xf32, #tpu.memory_space<vmem>>, vector<4x8x1xf32>,
      %cst_48 = arith.constant 0.000000e+00 : f32
      %50 = vector.broadcast %cst_48 : f32 to vector<4x8x1xf32>
      %c0_49 = arith.constant 0 : index
      %c0_50 = arith.constant 0 : index
      %c0_51 = arith.constant 0 : index
      %51 = vector.load %arg8[%c0_49, %c0_50, %c0_51] : memref<4x8x1xf32, #tpu.memory_space<vmem>>, vector<4x8x1xf32>
      tpu.vector_store %arg8[%c0_49, %c0_50, %c0_51], %50 {strides = array<i32>} : memref<4x8x1xf32, #tpu.memory_space<vmem>>, vector<4x8x1xf32>,
      %cst_52 = arith.constant 0.000000e+00 : f32
      %52 = vector.broadcast %cst_52 : f32 to vector<4x8x8xf32>
      %c0_53 = arith.constant 0 : index
      %c0_54 = arith.constant 0 : index
      %c0_55 = arith.constant 0 : index
      %53 = vector.load %arg9[%c0_53, %c0_54, %c0_55] : memref<4x8x8xf32, #tpu.memory_space<vmem>>, vector<4x8x8xf32>
      tpu.vector_store %arg9[%c0_53, %c0_54, %c0_55], %52 {strides = array<i32>} : memref<4x8x8xf32, #tpu.memory_space<vmem>>, vector<4x8x8xf32>,
    } else {
    }
    %c0 = arith.constant 0 : index
    %c0_1 = arith.constant 0 : index
    %c0_2 = arith.constant 0 : index
    %c0_3 = arith.constant 0 : index
    %3 = vector.load %arg2[%c0, %c0_1, %c0_2, %c0_3] : memref<1x4x8x8xbf16, #tpu.memory_space<vmem>>, vector<1x4x8x8xbf16>
    %4 = vector.shape_cast %3 : vector<1x4x8x8xbf16> to vector<4x8x8xbf16>
    %c0_4 = arith.constant 0 : index
    %c0_5 = arith.constant 0 : index
    %c0_6 = arith.constant 0 : index
    %c0_7 = arith.constant 0 : index
    %5 = vector.load %arg3[%c0_4, %c0_5, %c0_6, %c0_7] : memref<1x4x8x8xbf16, #tpu.memory_space<vmem>>, vector<1x4x8x8xbf16>
    %6 = vector.shape_cast %5 : vector<1x4x8x8xbf16> to vector<4x8x8xbf16>
    %c0_8 = arith.constant 0 : index
    %c0_9 = arith.constant 0 : index
    %c0_10 = arith.constant 0 : index
    %c0_11 = arith.constant 0 : index
    %7 = vector.load %arg4[%c0_8, %c0_9, %c0_10, %c0_11] : memref<1x4x8x8xbf16, #tpu.memory_space<vmem>>, vector<1x4x8x8xbf16>
    %8 = vector.shape_cast %7 : vector<1x4x8x8xbf16> to vector<4x8x8xbf16>
    %c0_12 = arith.constant 0 : index
    %c0_13 = arith.constant 0 : index
    %c0_14 = arith.constant 0 : index
    %9 = vector.load %arg5[%c0_12, %c0_13, %c0_14] : memref<1x8x8xf32, #tpu.memory_space<vmem>>, vector<1x8x8xf32>
    %10 = vector.shape_cast %9 : vector<1x8x8xf32> to vector<8x8xf32>
    %cst = arith.constant dense<0.000000e+00> : vector<4x8x8xf32>
    %11 = tpu.matmul %4, %6, %cst {dimension_numbers = #tpu.dot_dimension_numbers<[2], [2], [1], [1], [0, 0, 0, 1, 1, 1], [0], [0]>} : vector<4x8x8xbf16>, vector<4x8x8xbf16>, vector<4x8x8xf32> -> vector<4x8x8xf32>
    %cst_15 = arith.constant 0.353553385 : f32
    %12 = vector.broadcast %cst_15 : f32 to vector<4x8x8xf32>
    %13 = arith.mulf %11, %12 : vector<4x8x8xf32>
    %14 = vector.shape_cast %10 : vector<8x8xf32> to vector<1x8x8xf32>
    %cst_16 = arith.constant 0.000000e+00 : f32
    %15 = vector.broadcast %cst_16 : f32 to vector<1x8x8xf32>
    %16 = arith.cmpf oeq, %14, %15 : vector<1x8x8xf32>
    %cst_17 = arith.constant -1.000000e+04 : f32
    %17 = vector.shape_cast %16 : vector<1x8x8xi1> to vector<1x8x8xi1>
    %18 = vector.broadcast %17 : vector<1x8x8xi1> to vector<4x8x8xi1>
    %19 = vector.broadcast %cst_17 : f32 to vector<4x8x8xf32>
    %20 = arith.select %18, %19, %13 : vector<4x8x8xi1>, vector<4x8x8xf32>
    %c0_18 = arith.constant 0 : index
    %c0_19 = arith.constant 0 : index
    %c0_20 = arith.constant 0 : index
    %21 = vector.load %arg7[%c0_18, %c0_19, %c0_20] : memref<4x8x1xf32, #tpu.memory_space<vmem>>, vector<4x8x1xf32>
    %cst_21 = arith.constant dense<0xFF800000> : vector<4x8xf32>
    %22 = vector.multi_reduction <maximumf>, %20, %cst_21 [2] : vector<4x8x8xf32> to vector<4x8xf32>
    %23 = vector.shape_cast %22 : vector<4x8xf32> to vector<4x8x1xf32>
    %24 = arith.maximumf %21, %23 : vector<4x8x1xf32>
    %c0_22 = arith.constant 0 : index
    %c0_23 = arith.constant 0 : index
    %c0_24 = arith.constant 0 : index
    %25 = vector.load %arg7[%c0_22, %c0_23, %c0_24] : memref<4x8x1xf32, #tpu.memory_space<vmem>>, vector<4x8x1xf32>
    %26 = arith.subf %25, %24 : vector<4x8x1xf32>
    %27 = math.exp %26 : vector<4x8x1xf32>
    %28 = vector.broadcast %24 : vector<4x8x1xf32> to vector<4x8x8xf32>
    %29 = arith.subf %20, %28 : vector<4x8x8xf32>
    %30 = math.exp %29 : vector<4x8x8xf32>
    %c0_25 = arith.constant 0 : index
    %c0_26 = arith.constant 0 : index
    %c0_27 = arith.constant 0 : index
    %31 = vector.load %arg8[%c0_25, %c0_26, %c0_27] : memref<4x8x1xf32, #tpu.memory_space<vmem>>, vector<4x8x1xf32>
    %32 = arith.mulf %27, %31 : vector<4x8x1xf32>
    %cst_28 = arith.constant dense<0.000000e+00> : vector<4x8xf32>
    %33 = vector.multi_reduction <add>, %30, %cst_28 [2] : vector<4x8x8xf32> to vector<4x8xf32>
    %34 = vector.shape_cast %33 : vector<4x8xf32> to vector<4x8x1xf32>
    %35 = arith.addf %32, %34 : vector<4x8x1xf32>
    %c0_29 = arith.constant 0 : index
    %c0_30 = arith.constant 0 : index
    %c0_31 = arith.constant 0 : index
    %36 = vector.load %arg8[%c0_29, %c0_30, %c0_31] : memref<4x8x1xf32, #tpu.memory_space<vmem>>, vector<4x8x1xf32>
    tpu.vector_store %arg8[%c0_29, %c0_30, %c0_31], %35 {strides = array<i32>} : memref<4x8x1xf32, #tpu.memory_space<vmem>>, vector<4x8x1xf32>,
    %37 = arith.truncf %30 : vector<4x8x8xf32> to vector<4x8x8xbf16>
    %cst_32 = arith.constant dense<0.000000e+00> : vector<4x8x8xf32>
    %38 = tpu.matmul %37, %8, %cst_32 {dimension_numbers = #tpu.dot_dimension_numbers<[2], [1], [1], [2], [0, 0, 0, 1, 1, 2], [0], [0]>} : vector<4x8x8xbf16>, vector<4x8x8xbf16>, vector<4x8x8xf32> -> vector<4x8x8xf32>
    %c0_33 = arith.constant 0 : index
    %c0_34 = arith.constant 0 : index
    %c0_35 = arith.constant 0 : index
    %39 = vector.load %arg9[%c0_33, %c0_34, %c0_35] : memref<4x8x8xf32, #tpu.memory_space<vmem>>, vector<4x8x8xf32>
    %40 = vector.broadcast %27 : vector<4x8x1xf32> to vector<4x8x8xf32>
    %41 = arith.mulf %40, %39 : vector<4x8x8xf32>
    %42 = arith.addf %41, %38 : vector<4x8x8xf32>
    %c0_36 = arith.constant 0 : index
    %c0_37 = arith.constant 0 : index
    %c0_38 = arith.constant 0 : index
    %43 = vector.load %arg9[%c0_36, %c0_37, %c0_38] : memref<4x8x8xf32, #tpu.memory_space<vmem>>, vector<4x8x8xf32>
    tpu.vector_store %arg9[%c0_36, %c0_37, %c0_38], %42 {strides = array<i32>} : memref<4x8x8xf32, #tpu.memory_space<vmem>>, vector<4x8x8xf32>,
    %c0_39 = arith.constant 0 : index
    %c0_40 = arith.constant 0 : index
    %c0_41 = arith.constant 0 : index
    %44 = vector.load %arg7[%c0_39, %c0_40, %c0_41] : memref<4x8x1xf32, #tpu.memory_space<vmem>>, vector<4x8x1xf32>
    tpu.vector_store %arg7[%c0_39, %c0_40, %c0_41], %24 {strides = array<i32>} : memref<4x8x1xf32, #tpu.memory_space<vmem>>, vector<4x8x1xf32>,
    %c0_i32_42 = arith.constant 0 : i32
    %45 = arith.cmpi eq, %arg1, %c0_i32_42 : i32
    %46 = arith.extui %45 : i1 to i32
    %c0_i32_43 = arith.constant 0 : i32
    %47 = arith.cmpi ne, %46, %c0_i32_43 : i32
    scf.if %47 {
      %c0_44 = arith.constant 0 : index
      %c0_45 = arith.constant 0 : index
      %c0_46 = arith.constant 0 : index
      %48 = vector.load %arg9[%c0_44, %c0_45, %c0_46] : memref<4x8x8xf32, #tpu.memory_space<vmem>>, vector<4x8x8xf32>
      %c0_47 = arith.constant 0 : index
      %c0_48 = arith.constant 0 : index
      %c0_49 = arith.constant 0 : index
      %49 = vector.load %arg8[%c0_47, %c0_48, %c0_49] : memref<4x8x1xf32, #tpu.memory_space<vmem>>, vector<4x8x1xf32>
      %50 = tpu.reciprocal %49 {approx = true} : vector<4x8x1xf32> -> vector<4x8x1xf32>
      %51 = vector.broadcast %50 : vector<4x8x1xf32> to vector<4x8x8xf32>
      %52 = arith.mulf %48, %51 : vector<4x8x8xf32>
      %53 = arith.truncf %52 : vector<4x8x8xf32> to vector<4x8x8xbf16>
      %c0_50 = arith.constant 0 : index
      %c0_51 = arith.constant 0 : index
      %c0_52 = arith.constant 0 : index
      %c0_53 = arith.constant 0 : index
      %54 = vector.load %arg6[%c0_50, %c0_51, %c0_52, %c0_53] : memref<1x4x8x8xbf16, #tpu.memory_space<vmem>>, vector<1x4x8x8xbf16>
      %55 = vector.shape_cast %54 : vector<1x4x8x8xbf16> to vector<4x8x8xbf16>
      %56 = vector.shape_cast %53 : vector<4x8x8xbf16> to vector<1x4x8x8xbf16>
      tpu.vector_store %arg6[%c0_50, %c0_51, %c0_52, %c0_53], %56 {strides = array<i32>} : memref<1x4x8x8xbf16, #tpu.memory_space<vmem>>, vector<1x4x8x8xbf16>,
    } else {
    }
    return
  }
  func.func @transform_0(%arg0: i32, %arg1: i32) -> (i32, i32, i32, i32) {
    %c0_i32 = arith.constant 0 : i32
    %c0_i32_0 = arith.constant 0 : i32
    %c0_i32_1 = arith.constant 0 : i32
    %c0_i32_2 = arith.constant 0 : i32
    return %arg0, %c0_i32, %c0_i32_0, %c0_i32_1 : i32, i32, i32, i32
  }
  func.func @transform_1(%arg0: i32, %arg1: i32) -> (i32, i32, i32, i32) {
    %c0_i32 = arith.constant 0 : i32
    %c0_i32_0 = arith.constant 0 : i32
    %c0_i32_1 = arith.constant 0 : i32
    return %arg0, %c0_i32, %arg1, %c0_i32_0 : i32, i32, i32, i32
  }
  func.func @transform_2(%arg0: i32, %arg1: i32) -> (i32, i32, i32, i32) {
    %c0_i32 = arith.constant 0 : i32
    %c0_i32_0 = arith.constant 0 : i32
    %c0_i32_1 = arith.constant 0 : i32
    return %arg0, %c0_i32, %arg1, %c0_i32_0 : i32, i32, i32, i32
  }
  func.func @transform_3(%arg0: i32, %arg1: i32) -> (i32, i32, i32) {
    %c0_i32 = arith.constant 0 : i32
    %c0_i32_0 = arith.constant 0 : i32
    return %arg0, %c0_i32, %arg1 : i32, i32, i32
  }
  func.func @transform_4(%arg0: i32, %arg1: i32) -> (i32, i32, i32, i32) {
    %c0_i32 = arith.constant 0 : i32
    %c0_i32_0 = arith.constant 0 : i32
    %c0_i32_1 = arith.constant 0 : i32
    %c0_i32_2 = arith.constant 0 : i32
    return %arg0, %c0_i32, %c0_i32_0, %c0_i32_1 : i32, i32, i32, i32
  }
}

module attributes {stable_mosaic.version = 11 : i64} {
  func.func @_matmul_res_ln_kernel(%arg0: i32, %arg1: i32, %arg2: memref<16x32xbf16, #tpu.memory_space<vmem>>, %arg3: memref<32x32xbf16, #tpu.memory_space<vmem>>, %arg4: memref<1x32xf32, #tpu.memory_space<vmem>>, %arg5: memref<16x32xbf16, #tpu.memory_space<vmem>>, %arg6: memref<1x32xf32, #tpu.memory_space<vmem>>, %arg7: memref<1x32xf32, #tpu.memory_space<vmem>>, %arg8: memref<16x32xbf16, #tpu.memory_space<vmem>>, %arg9: memref<16x32xf32, #tpu.memory_space<vmem>>) attributes {dimension_semantics = [#tpu.dimension_semantics<parallel>, #tpu.dimension_semantics<arbitrary>], iteration_bounds = array<i64: 1, 1>, scalar_prefetch = 0 : i64, scratch_operands = 1 : i64, tpu.core_type = #tpu.core_type<tc>, window_params = [{transform_indices = @transform_0, window_bounds = array<i64: 16, 32>}, {transform_indices = @transform_1, window_bounds = array<i64: 32, 32>}, {pipeline_mode = #tpu.pipeline_mode<synchronous>, transform_indices = @transform_2, window_bounds = array<i64: 1, 32>}, {transform_indices = @transform_3, window_bounds = array<i64: 16, 32>}, {pipeline_mode = #tpu.pipeline_mode<synchronous>, transform_indices = @transform_4, window_bounds = array<i64: 1, 32>}, {pipeline_mode = #tpu.pipeline_mode<synchronous>, transform_indices = @transform_5, window_bounds = array<i64: 1, 32>}, {transform_indices = @transform_6, window_bounds = array<i64: 16, 32>}]} {
    %c0_i32 = arith.constant 0 : i32
    %0 = arith.cmpi eq, %arg1, %c0_i32 : i32
    %1 = arith.extui %0 : i1 to i32
    %c0_i32_0 = arith.constant 0 : i32
    %2 = arith.cmpi ne, %1, %c0_i32_0 : i32
    scf.if %2 {
      %cst_10 = arith.constant 0.000000e+00 : f32
      %12 = vector.broadcast %cst_10 : f32 to vector<16x32xf32>
      %c0_11 = arith.constant 0 : index
      %c0_12 = arith.constant 0 : index
      %13 = vector.load %arg9[%c0_11, %c0_12] : memref<16x32xf32, #tpu.memory_space<vmem>>, vector<16x32xf32>
      tpu.vector_store %arg9[%c0_11, %c0_12], %12 {strides = array<i32>} : memref<16x32xf32, #tpu.memory_space<vmem>>, vector<16x32xf32>,
    } else {
    }
    %c0 = arith.constant 0 : index
    %c0_1 = arith.constant 0 : index
    %3 = vector.load %arg9[%c0, %c0_1] : memref<16x32xf32, #tpu.memory_space<vmem>>, vector<16x32xf32>
    %c0_2 = arith.constant 0 : index
    %c0_3 = arith.constant 0 : index
    %4 = vector.load %arg2[%c0_2, %c0_3] : memref<16x32xbf16, #tpu.memory_space<vmem>>, vector<16x32xbf16>
    %c0_4 = arith.constant 0 : index
    %c0_5 = arith.constant 0 : index
    %5 = vector.load %arg3[%c0_4, %c0_5] : memref<32x32xbf16, #tpu.memory_space<vmem>>, vector<32x32xbf16>
    %cst = arith.constant dense<0.000000e+00> : vector<16x32xf32>
    %6 = tpu.matmul %4, %5, %cst {dimension_numbers = #tpu.dot_dimension_numbers<[1], [0], [0], [1], [0, 0, 1, 1], [], []>} : vector<16x32xbf16>, vector<32x32xbf16>, vector<16x32xf32> -> vector<16x32xf32>
    %7 = arith.addf %3, %6 : vector<16x32xf32>
    %c0_6 = arith.constant 0 : index
    %c0_7 = arith.constant 0 : index
    %8 = vector.load %arg9[%c0_6, %c0_7] : memref<16x32xf32, #tpu.memory_space<vmem>>, vector<16x32xf32>
    tpu.vector_store %arg9[%c0_6, %c0_7], %7 {strides = array<i32>} : memref<16x32xf32, #tpu.memory_space<vmem>>, vector<16x32xf32>,
    %c0_i32_8 = arith.constant 0 : i32
    %9 = arith.cmpi eq, %arg1, %c0_i32_8 : i32
    %10 = arith.extui %9 : i1 to i32
    %c0_i32_9 = arith.constant 0 : i32
    %11 = arith.cmpi ne, %10, %c0_i32_9 : i32
    scf.if %11 {
      %c0_10 = arith.constant 0 : index
      %c0_11 = arith.constant 0 : index
      %12 = vector.load %arg9[%c0_10, %c0_11] : memref<16x32xf32, #tpu.memory_space<vmem>>, vector<16x32xf32>
      %c0_12 = arith.constant 0 : index
      %c0_13 = arith.constant 0 : index
      %13 = vector.load %arg4[%c0_12, %c0_13] : memref<1x32xf32, #tpu.memory_space<vmem>>, vector<1x32xf32>
      %14 = vector.broadcast %13 : vector<1x32xf32> to vector<16x32xf32>
      %15 = arith.addf %12, %14 : vector<16x32xf32>
      %c0_14 = arith.constant 0 : index
      %c0_15 = arith.constant 0 : index
      %16 = vector.load %arg5[%c0_14, %c0_15] : memref<16x32xbf16, #tpu.memory_space<vmem>>, vector<16x32xbf16>
      %17 = arith.extf %16 : vector<16x32xbf16> to vector<16x32xf32>
      %18 = arith.addf %15, %17 : vector<16x32xf32>
      %cst_16 = arith.constant dense<0.000000e+00> : vector<16xf32>
      %19 = vector.multi_reduction <add>, %18, %cst_16 [1] : vector<16x32xf32> to vector<16xf32>
      %20 = vector.shape_cast %19 : vector<16xf32> to vector<16x1xf32>
      %cst_17 = arith.constant 3.200000e+01 : f32
      %21 = vector.broadcast %cst_17 : f32 to vector<16x1xf32>
      %22 = arith.divf %20, %21 : vector<16x1xf32>
      %23 = vector.broadcast %22 : vector<16x1xf32> to vector<16x32xf32>
      %24 = arith.subf %18, %23 : vector<16x32xf32>
      %25 = arith.mulf %24, %24 : vector<16x32xf32>
      %cst_18 = arith.constant dense<0.000000e+00> : vector<16xf32>
      %26 = vector.multi_reduction <add>, %25, %cst_18 [1] : vector<16x32xf32> to vector<16xf32>
      %27 = vector.shape_cast %26 : vector<16xf32> to vector<16x1xf32>
      %cst_19 = arith.constant 3.200000e+01 : f32
      %28 = vector.broadcast %cst_19 : f32 to vector<16x1xf32>
      %29 = arith.divf %27, %28 : vector<16x1xf32>
      %30 = vector.broadcast %22 : vector<16x1xf32> to vector<16x32xf32>
      %31 = arith.subf %18, %30 : vector<16x32xf32>
      %cst_20 = arith.constant 9.99999996E-13 : f32
      %32 = vector.broadcast %cst_20 : f32 to vector<16x1xf32>
      %33 = arith.addf %29, %32 : vector<16x1xf32>
      %34 = math.rsqrt %33 : vector<16x1xf32>
      %35 = vector.broadcast %34 : vector<16x1xf32> to vector<16x32xf32>
      %36 = arith.mulf %31, %35 : vector<16x32xf32>
      %c0_21 = arith.constant 0 : index
      %c0_22 = arith.constant 0 : index
      %37 = vector.load %arg6[%c0_21, %c0_22] : memref<1x32xf32, #tpu.memory_space<vmem>>, vector<1x32xf32>
      %38 = vector.broadcast %37 : vector<1x32xf32> to vector<16x32xf32>
      %39 = arith.mulf %36, %38 : vector<16x32xf32>
      %c0_23 = arith.constant 0 : index
      %c0_24 = arith.constant 0 : index
      %40 = vector.load %arg7[%c0_23, %c0_24] : memref<1x32xf32, #tpu.memory_space<vmem>>, vector<1x32xf32>
      %41 = vector.broadcast %40 : vector<1x32xf32> to vector<16x32xf32>
      %42 = arith.addf %39, %41 : vector<16x32xf32>
      %43 = arith.truncf %42 : vector<16x32xf32> to vector<16x32xbf16>
      %c0_25 = arith.constant 0 : index
      %c0_26 = arith.constant 0 : index
      %44 = vector.load %arg8[%c0_25, %c0_26] : memref<16x32xbf16, #tpu.memory_space<vmem>>, vector<16x32xbf16>
      tpu.vector_store %arg8[%c0_25, %c0_26], %43 {strides = array<i32>} : memref<16x32xbf16, #tpu.memory_space<vmem>>, vector<16x32xbf16>,
    } else {
    }
    return
  }
  func.func @transform_0(%arg0: i32, %arg1: i32) -> (i32, i32) {
    %c0_i32 = arith.constant 0 : i32
    return %arg0, %arg1 : i32, i32
  }
  func.func @transform_1(%arg0: i32, %arg1: i32) -> (i32, i32) {
    %c0_i32 = arith.constant 0 : i32
    %c0_i32_0 = arith.constant 0 : i32
    return %arg1, %c0_i32 : i32, i32
  }
  func.func @transform_2(%arg0: i32, %arg1: i32) -> (i32, i32) {
    %c0_i32 = arith.constant 0 : i32
    %c0_i32_0 = arith.constant 0 : i32
    %c0_i32_1 = arith.constant 0 : i32
    return %c0_i32, %c0_i32_0 : i32, i32
  }
  func.func @transform_3(%arg0: i32, %arg1: i32) -> (i32, i32) {
    %c0_i32 = arith.constant 0 : i32
    %c0_i32_0 = arith.constant 0 : i32
    return %arg0, %c0_i32 : i32, i32
  }
  func.func @transform_4(%arg0: i32, %arg1: i32) -> (i32, i32) {
    %c0_i32 = arith.constant 0 : i32
    %c0_i32_0 = arith.constant 0 : i32
    %c0_i32_1 = arith.constant 0 : i32
    return %c0_i32, %c0_i32_0 : i32, i32
  }
  func.func @transform_5(%arg0: i32, %arg1: i32) -> (i32, i32) {
    %c0_i32 = arith.constant 0 : i32
    %c0_i32_0 = arith.constant 0 : i32
    %c0_i32_1 = arith.constant 0 : i32
    return %c0_i32, %c0_i32_0 : i32, i32
  }
  func.func @transform_6(%arg0: i32, %arg1: i32) -> (i32, i32) {
    %c0_i32 = arith.constant 0 : i32
    %c0_i32_0 = arith.constant 0 : i32
    return %arg0, %c0_i32 : i32, i32
  }
}

module attributes {stable_mosaic.version = 11 : i64} {
  func.func @_matmul_bias_kernel(%arg0: i32, %arg1: i32, %arg2: i32, %arg3: memref<16x32xbf16, #tpu.memory_space<vmem>>, %arg4: memref<32x32xbf16, #tpu.memory_space<vmem>>, %arg5: memref<1x32xf32, #tpu.memory_space<vmem>>, %arg6: memref<16x32xbf16, #tpu.memory_space<vmem>>, %arg7: memref<16x32xf32, #tpu.memory_space<vmem>>) attributes {dimension_semantics = [#tpu.dimension_semantics<parallel>, #tpu.dimension_semantics<parallel>, #tpu.dimension_semantics<arbitrary>], iteration_bounds = array<i64: 1, 1, 1>, scalar_prefetch = 0 : i64, scratch_operands = 1 : i64, tpu.core_type = #tpu.core_type<tc>, window_params = [{transform_indices = @transform_0, window_bounds = array<i64: 16, 32>}, {transform_indices = @transform_1, window_bounds = array<i64: 32, 32>}, {transform_indices = @transform_2, window_bounds = array<i64: 1, 32>}, {transform_indices = @transform_3, window_bounds = array<i64: 16, 32>}]} {
    %c0_i32 = arith.constant 0 : i32
    %0 = arith.cmpi eq, %arg2, %c0_i32 : i32
    %1 = arith.extui %0 : i1 to i32
    %c0_i32_0 = arith.constant 0 : i32
    %2 = arith.cmpi ne, %1, %c0_i32_0 : i32
    scf.if %2 {
      %cst_10 = arith.constant 0.000000e+00 : f32
      %12 = vector.broadcast %cst_10 : f32 to vector<16x32xf32>
      %c0_11 = arith.constant 0 : index
      %c0_12 = arith.constant 0 : index
      %13 = vector.load %arg7[%c0_11, %c0_12] : memref<16x32xf32, #tpu.memory_space<vmem>>, vector<16x32xf32>
      tpu.vector_store %arg7[%c0_11, %c0_12], %12 {strides = array<i32>} : memref<16x32xf32, #tpu.memory_space<vmem>>, vector<16x32xf32>,
    } else {
    }
    %c0 = arith.constant 0 : index
    %c0_1 = arith.constant 0 : index
    %3 = vector.load %arg7[%c0, %c0_1] : memref<16x32xf32, #tpu.memory_space<vmem>>, vector<16x32xf32>
    %c0_2 = arith.constant 0 : index
    %c0_3 = arith.constant 0 : index
    %4 = vector.load %arg3[%c0_2, %c0_3] : memref<16x32xbf16, #tpu.memory_space<vmem>>, vector<16x32xbf16>
    %c0_4 = arith.constant 0 : index
    %c0_5 = arith.constant 0 : index
    %5 = vector.load %arg4[%c0_4, %c0_5] : memref<32x32xbf16, #tpu.memory_space<vmem>>, vector<32x32xbf16>
    %cst = arith.constant dense<0.000000e+00> : vector<16x32xf32>
    %6 = tpu.matmul %4, %5, %cst {dimension_numbers = #tpu.dot_dimension_numbers<[1], [0], [0], [1], [0, 0, 1, 1], [], []>} : vector<16x32xbf16>, vector<32x32xbf16>, vector<16x32xf32> -> vector<16x32xf32>
    %7 = arith.addf %3, %6 : vector<16x32xf32>
    %c0_6 = arith.constant 0 : index
    %c0_7 = arith.constant 0 : index
    %8 = vector.load %arg7[%c0_6, %c0_7] : memref<16x32xf32, #tpu.memory_space<vmem>>, vector<16x32xf32>
    tpu.vector_store %arg7[%c0_6, %c0_7], %7 {strides = array<i32>} : memref<16x32xf32, #tpu.memory_space<vmem>>, vector<16x32xf32>,
    %c0_i32_8 = arith.constant 0 : i32
    %9 = arith.cmpi eq, %arg2, %c0_i32_8 : i32
    %10 = arith.extui %9 : i1 to i32
    %c0_i32_9 = arith.constant 0 : i32
    %11 = arith.cmpi ne, %10, %c0_i32_9 : i32
    scf.if %11 {
      %c0_10 = arith.constant 0 : index
      %c0_11 = arith.constant 0 : index
      %12 = vector.load %arg7[%c0_10, %c0_11] : memref<16x32xf32, #tpu.memory_space<vmem>>, vector<16x32xf32>
      %c0_12 = arith.constant 0 : index
      %c0_13 = arith.constant 0 : index
      %13 = vector.load %arg5[%c0_12, %c0_13] : memref<1x32xf32, #tpu.memory_space<vmem>>, vector<1x32xf32>
      %14 = vector.broadcast %13 : vector<1x32xf32> to vector<16x32xf32>
      %15 = arith.addf %12, %14 : vector<16x32xf32>
      %16 = arith.truncf %15 : vector<16x32xf32> to vector<16x32xbf16>
      %c0_14 = arith.constant 0 : index
      %c0_15 = arith.constant 0 : index
      %17 = vector.load %arg6[%c0_14, %c0_15] : memref<16x32xbf16, #tpu.memory_space<vmem>>, vector<16x32xbf16>
      tpu.vector_store %arg6[%c0_14, %c0_15], %16 {strides = array<i32>} : memref<16x32xbf16, #tpu.memory_space<vmem>>, vector<16x32xbf16>,
    } else {
    }
    return
  }
  func.func @transform_0(%arg0: i32, %arg1: i32, %arg2: i32) -> (i32, i32) {
    %c0_i32 = arith.constant 0 : i32
    return %arg0, %arg2 : i32, i32
  }
  func.func @transform_1(%arg0: i32, %arg1: i32, %arg2: i32) -> (i32, i32) {
    %c0_i32 = arith.constant 0 : i32
    return %arg2, %arg1 : i32, i32
  }
  func.func @transform_2(%arg0: i32, %arg1: i32, %arg2: i32) -> (i32, i32) {
    %c0_i32 = arith.constant 0 : i32
    %c0_i32_0 = arith.constant 0 : i32
    return %c0_i32, %arg1 : i32, i32
  }
  func.func @transform_3(%arg0: i32, %arg1: i32, %arg2: i32) -> (i32, i32) {
    %c0_i32 = arith.constant 0 : i32
    return %arg0, %arg1 : i32, i32
  }
}

module attributes {stable_mosaic.version = 11 : i64} {
  func.func @_matmul_bias_kernel(%arg0: i32, %arg1: i32, %arg2: i32, %arg3: memref<16x32xbf16, #tpu.memory_space<vmem>>, %arg4: memref<32x64xbf16, #tpu.memory_space<vmem>>, %arg5: memref<1x64xf32, #tpu.memory_space<vmem>>, %arg6: memref<16x64xbf16, #tpu.memory_space<vmem>>, %arg7: memref<16x64xf32, #tpu.memory_space<vmem>>) attributes {dimension_semantics = [#tpu.dimension_semantics<parallel>, #tpu.dimension_semantics<parallel>, #tpu.dimension_semantics<arbitrary>], iteration_bounds = array<i64: 1, 1, 1>, scalar_prefetch = 0 : i64, scratch_operands = 1 : i64, tpu.core_type = #tpu.core_type<tc>, window_params = [{transform_indices = @transform_0, window_bounds = array<i64: 16, 32>}, {transform_indices = @transform_1, window_bounds = array<i64: 32, 64>}, {transform_indices = @transform_2, window_bounds = array<i64: 1, 64>}, {transform_indices = @transform_3, window_bounds = array<i64: 16, 64>}]} {
    %c0_i32 = arith.constant 0 : i32
    %0 = arith.cmpi eq, %arg2, %c0_i32 : i32
    %1 = arith.extui %0 : i1 to i32
    %c0_i32_0 = arith.constant 0 : i32
    %2 = arith.cmpi ne, %1, %c0_i32_0 : i32
    scf.if %2 {
      %cst_10 = arith.constant 0.000000e+00 : f32
      %12 = vector.broadcast %cst_10 : f32 to vector<16x64xf32>
      %c0_11 = arith.constant 0 : index
      %c0_12 = arith.constant 0 : index
      %13 = vector.load %arg7[%c0_11, %c0_12] : memref<16x64xf32, #tpu.memory_space<vmem>>, vector<16x64xf32>
      tpu.vector_store %arg7[%c0_11, %c0_12], %12 {strides = array<i32>} : memref<16x64xf32, #tpu.memory_space<vmem>>, vector<16x64xf32>,
    } else {
    }
    %c0 = arith.constant 0 : index
    %c0_1 = arith.constant 0 : index
    %3 = vector.load %arg7[%c0, %c0_1] : memref<16x64xf32, #tpu.memory_space<vmem>>, vector<16x64xf32>
    %c0_2 = arith.constant 0 : index
    %c0_3 = arith.constant 0 : index
    %4 = vector.load %arg3[%c0_2, %c0_3] : memref<16x32xbf16, #tpu.memory_space<vmem>>, vector<16x32xbf16>
    %c0_4 = arith.constant 0 : index
    %c0_5 = arith.constant 0 : index
    %5 = vector.load %arg4[%c0_4, %c0_5] : memref<32x64xbf16, #tpu.memory_space<vmem>>, vector<32x64xbf16>
    %cst = arith.constant dense<0.000000e+00> : vector<16x64xf32>
    %6 = tpu.matmul %4, %5, %cst {dimension_numbers = #tpu.dot_dimension_numbers<[1], [0], [0], [1], [0, 0, 1, 1], [], []>} : vector<16x32xbf16>, vector<32x64xbf16>, vector<16x64xf32> -> vector<16x64xf32>
    %7 = arith.addf %3, %6 : vector<16x64xf32>
    %c0_6 = arith.constant 0 : index
    %c0_7 = arith.constant 0 : index
    %8 = vector.load %arg7[%c0_6, %c0_7] : memref<16x64xf32, #tpu.memory_space<vmem>>, vector<16x64xf32>
    tpu.vector_store %arg7[%c0_6, %c0_7], %7 {strides = array<i32>} : memref<16x64xf32, #tpu.memory_space<vmem>>, vector<16x64xf32>,
    %c0_i32_8 = arith.constant 0 : i32
    %9 = arith.cmpi eq, %arg2, %c0_i32_8 : i32
    %10 = arith.extui %9 : i1 to i32
    %c0_i32_9 = arith.constant 0 : i32
    %11 = arith.cmpi ne, %10, %c0_i32_9 : i32
    scf.if %11 {
      %c0_10 = arith.constant 0 : index
      %c0_11 = arith.constant 0 : index
      %12 = vector.load %arg7[%c0_10, %c0_11] : memref<16x64xf32, #tpu.memory_space<vmem>>, vector<16x64xf32>
      %c0_12 = arith.constant 0 : index
      %c0_13 = arith.constant 0 : index
      %13 = vector.load %arg5[%c0_12, %c0_13] : memref<1x64xf32, #tpu.memory_space<vmem>>, vector<1x64xf32>
      %14 = vector.broadcast %13 : vector<1x64xf32> to vector<16x64xf32>
      %15 = arith.addf %12, %14 : vector<16x64xf32>
      %16 = arith.truncf %15 : vector<16x64xf32> to vector<16x64xbf16>
      %c0_14 = arith.constant 0 : index
      %c0_15 = arith.constant 0 : index
      %17 = vector.load %arg6[%c0_14, %c0_15] : memref<16x64xbf16, #tpu.memory_space<vmem>>, vector<16x64xbf16>
      tpu.vector_store %arg6[%c0_14, %c0_15], %16 {strides = array<i32>} : memref<16x64xbf16, #tpu.memory_space<vmem>>, vector<16x64xbf16>,
    } else {
    }
    return
  }
  func.func @transform_0(%arg0: i32, %arg1: i32, %arg2: i32) -> (i32, i32) {
    %c0_i32 = arith.constant 0 : i32
    return %arg0, %arg2 : i32, i32
  }
  func.func @transform_1(%arg0: i32, %arg1: i32, %arg2: i32) -> (i32, i32) {
    %c0_i32 = arith.constant 0 : i32
    return %arg2, %arg1 : i32, i32
  }
  func.func @transform_2(%arg0: i32, %arg1: i32, %arg2: i32) -> (i32, i32) {
    %c0_i32 = arith.constant 0 : i32
    %c0_i32_0 = arith.constant 0 : i32
    return %c0_i32, %arg1 : i32, i32
  }
  func.func @transform_3(%arg0: i32, %arg1: i32, %arg2: i32) -> (i32, i32) {
    %c0_i32 = arith.constant 0 : i32
    return %arg0, %arg1 : i32, i32
  }
}

module attributes {stable_mosaic.version = 11 : i64} {
  func.func @_ffn_res_ln_kernel(%arg0: i32, %arg1: memref<16x32xbf16, #tpu.memory_space<vmem>>, %arg2: memref<32x64xbf16, #tpu.memory_space<vmem>>, %arg3: memref<1x64xf32, #tpu.memory_space<vmem>>, %arg4: memref<64x32xbf16, #tpu.memory_space<vmem>>, %arg5: memref<1x32xf32, #tpu.memory_space<vmem>>, %arg6: memref<1x32xf32, #tpu.memory_space<vmem>>, %arg7: memref<1x32xf32, #tpu.memory_space<vmem>>, %arg8: memref<16x32xbf16, #tpu.memory_space<vmem>>) attributes {dimension_semantics = [#tpu.dimension_semantics<parallel>], iteration_bounds = array<i64: 1>, scalar_prefetch = 0 : i64, scratch_operands = 0 : i64, tpu.core_type = #tpu.core_type<tc>, window_params = [{transform_indices = @transform_0, window_bounds = array<i64: 16, 32>}, {pipeline_mode = #tpu.pipeline_mode<synchronous>, transform_indices = @transform_1, window_bounds = array<i64: 32, 64>}, {pipeline_mode = #tpu.pipeline_mode<synchronous>, transform_indices = @transform_2, window_bounds = array<i64: 1, 64>}, {pipeline_mode = #tpu.pipeline_mode<synchronous>, transform_indices = @transform_3, window_bounds = array<i64: 64, 32>}, {pipeline_mode = #tpu.pipeline_mode<synchronous>, transform_indices = @transform_4, window_bounds = array<i64: 1, 32>}, {pipeline_mode = #tpu.pipeline_mode<synchronous>, transform_indices = @transform_5, window_bounds = array<i64: 1, 32>}, {pipeline_mode = #tpu.pipeline_mode<synchronous>, transform_indices = @transform_6, window_bounds = array<i64: 1, 32>}, {transform_indices = @transform_7, window_bounds = array<i64: 16, 32>}]} {
    %c0 = arith.constant 0 : index
    %c0_0 = arith.constant 0 : index
    %0 = vector.load %arg1[%c0, %c0_0] : memref<16x32xbf16, #tpu.memory_space<vmem>>, vector<16x32xbf16>
    %c0_1 = arith.constant 0 : index
    %c0_2 = arith.constant 0 : index
    %1 = vector.load %arg2[%c0_1, %c0_2] : memref<32x64xbf16, #tpu.memory_space<vmem>>, vector<32x64xbf16>
    %cst = arith.constant dense<0.000000e+00> : vector<16x64xf32>
    %2 = tpu.matmul %0, %1, %cst {dimension_numbers = #tpu.dot_dimension_numbers<[1], [0], [0], [1], [0, 0, 1, 1], [], []>} : vector<16x32xbf16>, vector<32x64xbf16>, vector<16x64xf32> -> vector<16x64xf32>
    %c0_3 = arith.constant 0 : index
    %c0_4 = arith.constant 0 : index
    %3 = vector.load %arg3[%c0_3, %c0_4] : memref<1x64xf32, #tpu.memory_space<vmem>>, vector<1x64xf32>
    %4 = vector.broadcast %3 : vector<1x64xf32> to vector<16x64xf32>
    %5 = arith.addf %2, %4 : vector<16x64xf32>
    %cst_5 = arith.constant 0.000000e+00 : f32
    %6 = vector.broadcast %cst_5 : f32 to vector<16x64xf32>
    %7 = arith.maximumf %5, %6 : vector<16x64xf32>
    %8 = arith.truncf %7 : vector<16x64xf32> to vector<16x64xbf16>
    %c0_6 = arith.constant 0 : index
    %c0_7 = arith.constant 0 : index
    %9 = vector.load %arg4[%c0_6, %c0_7] : memref<64x32xbf16, #tpu.memory_space<vmem>>, vector<64x32xbf16>
    %cst_8 = arith.constant dense<0.000000e+00> : vector<16x32xf32>
    %10 = tpu.matmul %8, %9, %cst_8 {dimension_numbers = #tpu.dot_dimension_numbers<[1], [0], [0], [1], [0, 0, 1, 1], [], []>} : vector<16x64xbf16>, vector<64x32xbf16>, vector<16x32xf32> -> vector<16x32xf32>
    %c0_9 = arith.constant 0 : index
    %c0_10 = arith.constant 0 : index
    %11 = vector.load %arg5[%c0_9, %c0_10] : memref<1x32xf32, #tpu.memory_space<vmem>>, vector<1x32xf32>
    %12 = vector.broadcast %11 : vector<1x32xf32> to vector<16x32xf32>
    %13 = arith.addf %10, %12 : vector<16x32xf32>
    %14 = arith.extf %0 : vector<16x32xbf16> to vector<16x32xf32>
    %15 = arith.addf %13, %14 : vector<16x32xf32>
    %cst_11 = arith.constant dense<0.000000e+00> : vector<16xf32>
    %16 = vector.multi_reduction <add>, %15, %cst_11 [1] : vector<16x32xf32> to vector<16xf32>
    %17 = vector.shape_cast %16 : vector<16xf32> to vector<16x1xf32>
    %cst_12 = arith.constant 3.200000e+01 : f32
    %18 = vector.broadcast %cst_12 : f32 to vector<16x1xf32>
    %19 = arith.divf %17, %18 : vector<16x1xf32>
    %20 = vector.broadcast %19 : vector<16x1xf32> to vector<16x32xf32>
    %21 = arith.subf %15, %20 : vector<16x32xf32>
    %22 = arith.mulf %21, %21 : vector<16x32xf32>
    %cst_13 = arith.constant dense<0.000000e+00> : vector<16xf32>
    %23 = vector.multi_reduction <add>, %22, %cst_13 [1] : vector<16x32xf32> to vector<16xf32>
    %24 = vector.shape_cast %23 : vector<16xf32> to vector<16x1xf32>
    %cst_14 = arith.constant 3.200000e+01 : f32
    %25 = vector.broadcast %cst_14 : f32 to vector<16x1xf32>
    %26 = arith.divf %24, %25 : vector<16x1xf32>
    %27 = vector.broadcast %19 : vector<16x1xf32> to vector<16x32xf32>
    %28 = arith.subf %15, %27 : vector<16x32xf32>
    %cst_15 = arith.constant 9.99999996E-13 : f32
    %29 = vector.broadcast %cst_15 : f32 to vector<16x1xf32>
    %30 = arith.addf %26, %29 : vector<16x1xf32>
    %31 = math.rsqrt %30 : vector<16x1xf32>
    %32 = vector.broadcast %31 : vector<16x1xf32> to vector<16x32xf32>
    %33 = arith.mulf %28, %32 : vector<16x32xf32>
    %c0_16 = arith.constant 0 : index
    %c0_17 = arith.constant 0 : index
    %34 = vector.load %arg6[%c0_16, %c0_17] : memref<1x32xf32, #tpu.memory_space<vmem>>, vector<1x32xf32>
    %35 = vector.broadcast %34 : vector<1x32xf32> to vector<16x32xf32>
    %36 = arith.mulf %33, %35 : vector<16x32xf32>
    %c0_18 = arith.constant 0 : index
    %c0_19 = arith.constant 0 : index
    %37 = vector.load %arg7[%c0_18, %c0_19] : memref<1x32xf32, #tpu.memory_space<vmem>>, vector<1x32xf32>
    %38 = vector.broadcast %37 : vector<1x32xf32> to vector<16x32xf32>
    %39 = arith.addf %36, %38 : vector<16x32xf32>
    %40 = arith.truncf %39 : vector<16x32xf32> to vector<16x32xbf16>
    %c0_20 = arith.constant 0 : index
    %c0_21 = arith.constant 0 : index
    %41 = vector.load %arg8[%c0_20, %c0_21] : memref<16x32xbf16, #tpu.memory_space<vmem>>, vector<16x32xbf16>
    tpu.vector_store %arg8[%c0_20, %c0_21], %40 {strides = array<i32>} : memref<16x32xbf16, #tpu.memory_space<vmem>>, vector<16x32xbf16>,
    return
  }
  func.func @transform_0(%arg0: i32) -> (i32, i32) {
    %c0_i32 = arith.constant 0 : i32
    %c0_i32_0 = arith.constant 0 : i32
    return %arg0, %c0_i32 : i32, i32
  }
  func.func @transform_1(%arg0: i32) -> (i32, i32) {
    %c0_i32 = arith.constant 0 : i32
    %c0_i32_0 = arith.constant 0 : i32
    %c0_i32_1 = arith.constant 0 : i32
    return %c0_i32, %c0_i32_0 : i32, i32
  }
  func.func @transform_2(%arg0: i32) -> (i32, i32) {
    %c0_i32 = arith.constant 0 : i32
    %c0_i32_0 = arith.constant 0 : i32
    %c0_i32_1 = arith.constant 0 : i32
    return %c0_i32, %c0_i32_0 : i32, i32
  }
  func.func @transform_3(%arg0: i32) -> (i32, i32) {
    %c0_i32 = arith.constant 0 : i32
    %c0_i32_0 = arith.constant 0 : i32
    %c0_i32_1 = arith.constant 0 : i32
    return %c0_i32, %c0_i32_0 : i32, i32
  }
  func.func @transform_4(%arg0: i32) -> (i32, i32) {
    %c0_i32 = arith.constant 0 : i32
    %c0_i32_0 = arith.constant 0 : i32
    %c0_i32_1 = arith.constant 0 : i32
    return %c0_i32, %c0_i32_0 : i32, i32
  }
  func.func @transform_5(%arg0: i32) -> (i32, i32) {
    %c0_i32 = arith.constant 0 : i32
    %c0_i32_0 = arith.constant 0 : i32
    %c0_i32_1 = arith.constant 0 : i32
    return %c0_i32, %c0_i32_0 : i32, i32
  }
  func.func @transform_6(%arg0: i32) -> (i32, i32) {
    %c0_i32 = arith.constant 0 : i32
    %c0_i32_0 = arith.constant 0 : i32
    %c0_i32_1 = arith.constant 0 : i32
    return %c0_i32, %c0_i32_0 : i32, i32
  }
  func.func @transform_7(%arg0: i32) -> (i32, i32) {
    %c0_i32 = arith.constant 0 : i32
    %c0_i32_0 = arith.constant 0 : i32
    return %arg0, %c0_i32 : i32, i32
  }
}

module attributes {stable_mosaic.version = 11 : i64} {
  func.func @_matmul_bias_kernel(%arg0: i32, %arg1: i32, %arg2: i32, %arg3: memref<16x32xbf16, #tpu.memory_space<vmem>>, %arg4: memref<32x64xbf16, #tpu.memory_space<vmem>>, %arg5: memref<1x64xf32, #tpu.memory_space<vmem>>, %arg6: memref<16x64xf32, #tpu.memory_space<vmem>>, %arg7: memref<16x64xf32, #tpu.memory_space<vmem>>) attributes {dimension_semantics = [#tpu.dimension_semantics<parallel>, #tpu.dimension_semantics<parallel>, #tpu.dimension_semantics<arbitrary>], iteration_bounds = array<i64: 1, 1, 1>, scalar_prefetch = 0 : i64, scratch_operands = 1 : i64, tpu.core_type = #tpu.core_type<tc>, window_params = [{transform_indices = @transform_0, window_bounds = array<i64: 16, 32>}, {transform_indices = @transform_1, window_bounds = array<i64: 32, 64>}, {transform_indices = @transform_2, window_bounds = array<i64: 1, 64>}, {transform_indices = @transform_3, window_bounds = array<i64: 16, 64>}]} {
    %c0_i32 = arith.constant 0 : i32
    %0 = arith.cmpi eq, %arg2, %c0_i32 : i32
    %1 = arith.extui %0 : i1 to i32
    %c0_i32_0 = arith.constant 0 : i32
    %2 = arith.cmpi ne, %1, %c0_i32_0 : i32
    scf.if %2 {
      %cst_10 = arith.constant 0.000000e+00 : f32
      %12 = vector.broadcast %cst_10 : f32 to vector<16x64xf32>
      %c0_11 = arith.constant 0 : index
      %c0_12 = arith.constant 0 : index
      %13 = vector.load %arg7[%c0_11, %c0_12] : memref<16x64xf32, #tpu.memory_space<vmem>>, vector<16x64xf32>
      tpu.vector_store %arg7[%c0_11, %c0_12], %12 {strides = array<i32>} : memref<16x64xf32, #tpu.memory_space<vmem>>, vector<16x64xf32>,
    } else {
    }
    %c0 = arith.constant 0 : index
    %c0_1 = arith.constant 0 : index
    %3 = vector.load %arg7[%c0, %c0_1] : memref<16x64xf32, #tpu.memory_space<vmem>>, vector<16x64xf32>
    %c0_2 = arith.constant 0 : index
    %c0_3 = arith.constant 0 : index
    %4 = vector.load %arg3[%c0_2, %c0_3] : memref<16x32xbf16, #tpu.memory_space<vmem>>, vector<16x32xbf16>
    %c0_4 = arith.constant 0 : index
    %c0_5 = arith.constant 0 : index
    %5 = vector.load %arg4[%c0_4, %c0_5] : memref<32x64xbf16, #tpu.memory_space<vmem>>, vector<32x64xbf16>
    %cst = arith.constant dense<0.000000e+00> : vector<16x64xf32>
    %6 = tpu.matmul %4, %5, %cst {dimension_numbers = #tpu.dot_dimension_numbers<[1], [0], [0], [1], [0, 0, 1, 1], [], []>} : vector<16x32xbf16>, vector<32x64xbf16>, vector<16x64xf32> -> vector<16x64xf32>
    %7 = arith.addf %3, %6 : vector<16x64xf32>
    %c0_6 = arith.constant 0 : index
    %c0_7 = arith.constant 0 : index
    %8 = vector.load %arg7[%c0_6, %c0_7] : memref<16x64xf32, #tpu.memory_space<vmem>>, vector<16x64xf32>
    tpu.vector_store %arg7[%c0_6, %c0_7], %7 {strides = array<i32>} : memref<16x64xf32, #tpu.memory_space<vmem>>, vector<16x64xf32>,
    %c0_i32_8 = arith.constant 0 : i32
    %9 = arith.cmpi eq, %arg2, %c0_i32_8 : i32
    %10 = arith.extui %9 : i1 to i32
    %c0_i32_9 = arith.constant 0 : i32
    %11 = arith.cmpi ne, %10, %c0_i32_9 : i32
    scf.if %11 {
      %c0_10 = arith.constant 0 : index
      %c0_11 = arith.constant 0 : index
      %12 = vector.load %arg7[%c0_10, %c0_11] : memref<16x64xf32, #tpu.memory_space<vmem>>, vector<16x64xf32>
      %c0_12 = arith.constant 0 : index
      %c0_13 = arith.constant 0 : index
      %13 = vector.load %arg5[%c0_12, %c0_13] : memref<1x64xf32, #tpu.memory_space<vmem>>, vector<1x64xf32>
      %14 = vector.broadcast %13 : vector<1x64xf32> to vector<16x64xf32>
      %15 = arith.addf %12, %14 : vector<16x64xf32>
      %c0_14 = arith.constant 0 : index
      %c0_15 = arith.constant 0 : index
      %16 = vector.load %arg6[%c0_14, %c0_15] : memref<16x64xf32, #tpu.memory_space<vmem>>, vector<16x64xf32>
      tpu.vector_store %arg6[%c0_14, %c0_15], %15 {strides = array<i32>} : memref<16x64xf32, #tpu.memory_space<vmem>>, vector<16x64xf32>,
    } else {
    }
    return
  }
  func.func @transform_0(%arg0: i32, %arg1: i32, %arg2: i32) -> (i32, i32) {
    %c0_i32 = arith.constant 0 : i32
    return %arg0, %arg2 : i32, i32
  }
  func.func @transform_1(%arg0: i32, %arg1: i32, %arg2: i32) -> (i32, i32) {
    %c0_i32 = arith.constant 0 : i32
    return %arg2, %arg1 : i32, i32
  }
  func.func @transform_2(%arg0: i32, %arg1: i32, %arg2: i32) -> (i32, i32) {
    %c0_i32 = arith.constant 0 : i32
    %c0_i32_0 = arith.constant 0 : i32
    return %c0_i32, %arg1 : i32, i32
  }
  func.func @transform_3(%arg0: i32, %arg1: i32, %arg2: i32) -> (i32, i32) {
    %c0_i32 = arith.constant 0 : i32
    return %arg0, %arg1 : i32, i32
  }
}

</mosaic_0001>

<llo_original>
// kernel: decoder_forward.17
$region0: #{decoder_forward.17}
  #allocation0 [shape = 'u32[]', space=smem, size = 0x4, offset = 0x4, fixed_abs, tag = 'smem constant byte address 0x4 - core index']
  #allocation1 [shape = 'u32[144,128]{1,0:T(1,128)}', space=vmem, size = 0x12000, scoped, tag = 'internal scratch']
  #allocation2 [shape = 'f32[16,96]{1,0:T(8,128)}', space=vmem, size = 0x2000, scoped, tag = 'scratch operand']
  %s0 = inlined_call_operand.vmem [shape: bf16[16,32], index: 0, kind: input, shape index: {}]
  %s1 = inlined_call_operand.vmem [shape: bf16[32,96], index: 1, kind: input, shape index: {}]
  %s2 = inlined_call_operand.vmem [shape: f32[1,96], index: 2, kind: input, shape index: {}]
  %s3 = inlined_call_operand.vmem [shape: bf16[16,96], index: 3, kind: output, shape index: {}]
  %s4 = sld [smem:[#allocation0]]
  $region30: #{decoder_forward.17} parent=0
    _
  %s6 = ssub.s32 1, %s4
  %s7 = scalar_select 0, %s6, %s4
  // Predicated region
  $region2: #{decoder_forward.17} parent=0 // pred_check
    _
  $region3: #{decoder_forward.17} parent=0 // pred_check_branch
    %9 = sbr.rel (0) target = $region5
  $region4: #{decoder_forward.17} parent=0 // pred_region
    _
  $region5: #{decoder_forward.17} parent=0 // pred_fallthru
    _
  // Predicated region
  $region6: #{decoder_forward.17} parent=0 // pred_check
    _
  $region7: #{decoder_forward.17} parent=0 // pred_check_branch
    %11 = sbr.rel (0) target = $region9
  $region8: #{decoder_forward.17} parent=0 // pred_region
    _
  $region9: #{decoder_forward.17} parent=0 // pred_fallthru
    _
  // Predicated region
  $region10: #{decoder_forward.17} parent=0 // pred_check
    _
  $region11: #{decoder_forward.17} parent=0 // pred_check_branch
    %13 = sbr.rel (0) target = $region13
  $region12: #{decoder_forward.17} parent=0 // pred_region
    _
  $region13: #{decoder_forward.17} parent=0 // pred_fallthru
    _
  %p15 = scmp.eq.s32.totalorder 0, 0
  // Predicated region
  $region14: #{decoder_forward.17} parent=0 // pred_check
    %p16 = pneg %p15
  $region15: #{decoder_forward.17} parent=0 // pred_check_branch
    %18 = sbr.rel (%p16) target = $region17
  $region16: #{decoder_forward.17} parent=0 // pred_region
    %vm19 = vcmask 785408
    %20 = vst.msk [vmem:[#allocation2] sm:$0xff] %vm19, 0.0
    %21 = vst.msk [vmem:[#allocation2 + $0x8] sm:$0xff] %vm19, 0.0
  $region17: #{decoder_forward.17} parent=0 // pred_fallthru
    _
  %v22 = vld [vmem:[#allocation2] sm:$0xff]
  %v23 = vld [vmem:[#allocation2 + $0x8] sm:$0xff]
  %v24 = vld [vmem:[%s0] sm:$0xf]
  %v25 = vld [vmem:[%s0 + $0x4] sm:$0xf]
  %v26 = vld [vmem:[%s1] sm:$0xf]
  %v27 = vld [vmem:[%s1 + $0x4] sm:$0xf]
  %v28 = vld [vmem:[%s1 + $0x8] sm:$0xf]
  %v29 = vld [vmem:[%s1 + $0xc] sm:$0xf]
  %v32 = vunpack.c.l.b16 %v24
  %v33 = vunpack.c.l.b16 %v25
  %v34 = vpack.c.b16 %v33, %v32
  %v39 = vunpack.c.l.b16 %v26
  %v40 = vunpack.c.l.b16 %v27
  %v41 = vunpack.c.l.b16 %v28
  %v42 = vunpack.c.l.b16 %v29
  %v43 = vpack.c.b16 %v40, %v39
  %v44 = vpack.c.b16 %v42, %v41
  %vm47 = vcmask 261120
  %v49 = vsel %vm47, %v34, 0
  %51 = vmatprep.subr.bf16.mxu0 0
  %52 = vmatpush1.bf16.msra.mxu0 0
  %53 = vmatprep.subr.bf16.mxu0 0
  %54 = vmatpush1.bf16.msra.mxu0 0
  %55 = vmatprep.subr.bf16.mxu0 0
  %56 = vmatpush1.bf16.msra.mxu0 0
  %57 = vmatprep.subr.bf16.mxu0 0
  %58 = vmatpush1.bf16.msra.mxu0 0
  %59 = vmatprep.subr.bf16.mxu0 0
  %60 = vmatpush1.bf16.msra.mxu0 0
  %61 = vmatprep.subr.bf16.mxu0 0
  %62 = vmatpush1.bf16.msra.mxu0 0
  %63 = vmatprep.subr.bf16.mxu0 0
  %64 = vmatpush1.bf16.msra.mxu0 %v44
  %65 = vmatprep.subr.bf16.mxu0 0
  %66 = vmatpush1.bf16.msra.mxu0 %v43
  %67 = vmatprep.subr.bf16.mxu0 0
  %68 = vmatpush2.bf16.msra.mxu0 0
  %69 = vmatprep.subr.bf16.mxu0 0
  %70 = vmatpush2.bf16.msra.mxu0 0
  %71 = vmatprep.subr.bf16.mxu0 0
  %72 = vmatpush2.bf16.msra.mxu0 0
  %73 = vmatprep.subr.bf16.mxu0 0
  %74 = vmatpush2.bf16.msra.mxu0 0
  %75 = vmatprep.subr.bf16.mxu0 0
  %76 = vmatpush2.bf16.msra.mxu0 0
  %77 = vmatprep.subr.bf16.mxu0 0
  %78 = vmatpush2.bf16.msra.mxu0 0
  %79 = vmatprep.subr.bf16.mxu0 0
  %80 = vmatpush2.bf16.msra.mxu0 0
  %81 = vmatprep.subr.bf16.mxu0 0
  %82 = vmatpush2.bf16.msra.mxu0 0
  %83 = vmatprep.mubr.bf16.mxu0 0
  %84 = vmatmul.mubr.bf16.gmra.mxu0 %v49
  %v85 = vpop.f32.mrf.mxu0
  %v86 = vadd.f32 0.0, %v85
  %v87 = vpop.f32.mrf.mxu0
  %v88 = vpop.f32.mrf.mxu0
  %v89 = vadd.f32 0.0, %v88
  %v90 = vpop.f32.mrf.mxu0
  %91 = vdwg.mxu0
  %v92 = vadd.f32 %v22, %v86
  %v93 = vadd.f32 %v23, %v89
  %vm94 = vcmask 785408
  %95 = vst.msk [vmem:[#allocation2] sm:$0xff] %vm94, %v92
  %96 = vst.msk [vmem:[#allocation2 + $0x8] sm:$0xff] %vm94, %v93
  // Predicated region
  $region18: #{decoder_forward.17} parent=0 // pred_check
    %p97 = pneg %p15
  $region19: #{decoder_forward.17} parent=0 // pred_check_branch
    %99 = sbr.rel (%p97) target = $region21
  $region20: #{decoder_forward.17} parent=0 // pred_region
    %v100 = vld [vmem:[#allocation2] sm:$0xff]
    %v101 = vld [vmem:[#allocation2 + $0x8] sm:$0xff]
    %v102 = vld [vmem:[%s2] sm:$0x1]
    %v104 = vlaneseq
    %v105 = vshrl.u32 %v104, 7
    %v106 = vsub.s32 0, %v105
    %v107 = vrot.slane %v102, %v106
    %v109 = vadd.f32 %v100, %v107
    %v110 = vadd.f32 %v101, %v107
    %v111 = vpack.c.bf16 %v110, %v109
    %v113 = vunpack.c.l.b16 %v111
    %v114 = vunpack.c.h.b16 %v111
    %v115 = vpack.c.b16 %v113, %v113
    %v116 = vpack.c.b16 %v114, %v114
    %vm119 = vcmask 781312
    %120 = vst.msk [vmem:[%s3] sm:$0xf] %vm119, %v115
    %121 = vst.msk [vmem:[%s3 + $0x4] sm:$0xf] %vm119, %v116
  $region21: #{decoder_forward.17} parent=0 // pred_fallthru
    _
  // Predicated region
  $region22: #{decoder_forward.17} parent=0 // pred_check
    _
  $region23: #{decoder_forward.17} parent=0 // pred_check_branch
    %123 = sbr.rel (0) target = $region25
  $region24: #{decoder_forward.17} parent=0 // pred_region
    _
  $region25: #{decoder_forward.17} parent=0 // pred_fallthru
    _
  // Predicated region
  $region26: #{decoder_forward.17} parent=0 // pred_check
    _
  $region27: #{decoder_forward.17} parent=0 // pred_check_branch
    %125 = sbr.rel (0) target = $region29
  $region28: #{decoder_forward.17} parent=0 // pred_region
    _
  $region29: #{decoder_forward.17} parent=0 // pred_fallthru
    _

// kernel: decoder_forward.20
$region0: #{decoder_forward.20}
  #allocation0 [shape = 'u32[]', space=smem, size = 0x4, offset = 0x4, fixed_abs, tag = 'smem constant byte address 0x4 - core index']
  #allocation1 [shape = 'u32[144,128]{1,0:T(1,128)}', space=vmem, size = 0x12000, scoped, tag = 'internal scratch']
  #allocation2 [shape = 'f32[16,32]{1,0:T(8,128)}', space=vmem, size = 0x2000, scoped, tag = 'scratch operand']
  %s0 = inlined_call_operand.vmem [shape: bf16[16,32], index: 0, kind: input, shape index: {}]
  %s1 = inlined_call_operand.vmem [shape: bf16[32,32], index: 1, kind: input, shape index: {}]
  %s2 = inlined_call_operand.vmem [shape: f32[1,32], index: 2, kind: input, shape index: {}]
  %s3 = inlined_call_operand.vmem [shape: bf16[16,32], index: 3, kind: output, shape index: {}]
  %s4 = sld [smem:[#allocation0]]
  $region30: #{decoder_forward.20} parent=0
    _
  %s6 = ssub.s32 1, %s4
  %s7 = scalar_select 0, %s6, %s4
  // Predicated region
  $region2: #{decoder_forward.20} parent=0 // pred_check
    _
  $region3: #{decoder_forward.20} parent=0 // pred_check_branch
    %9 = sbr.rel (0) target = $region5
  $region4: #{decoder_forward.20} parent=0 // pred_region
    _
  $region5: #{decoder_forward.20} parent=0 // pred_fallthru
    _
  // Predicated region
  $region6: #{decoder_forward.20} parent=0 // pred_check
    _
  $region7: #{decoder_forward.20} parent=0 // pred_check_branch
    %11 = sbr.rel (0) target = $region9
  $region8: #{decoder_forward.20} parent=0 // pred_region
    _
  $region9: #{decoder_forward.20} parent=0 // pred_fallthru
    _
  // Predicated region
  $region10: #{decoder_forward.20} parent=0 // pred_check
    _
  $region11: #{decoder_forward.20} parent=0 // pred_check_branch
    %13 = sbr.rel (0) target = $region13
  $region12: #{decoder_forward.20} parent=0 // pred_region
    _
  $region13: #{decoder_forward.20} parent=0 // pred_fallthru
    _
  %p15 = scmp.eq.s32.totalorder 0, 0
  // Predicated region
  $region14: #{decoder_forward.20} parent=0 // pred_check
    %p16 = pneg %p15
  $region15: #{decoder_forward.20} parent=0 // pred_check_branch
    %18 = sbr.rel (%p16) target = $region17
  $region16: #{decoder_forward.20} parent=0 // pred_region
    %vm19 = vcmask 261120
    %20 = vst.msk [vmem:[#allocation2] sm:$0xff] %vm19, 0.0
    %21 = vst.msk [vmem:[#allocation2 + $0x8] sm:$0xff] %vm19, 0.0
  $region17: #{decoder_forward.20} parent=0 // pred_fallthru
    _
  %v22 = vld [vmem:[#allocation2] sm:$0xff]
  %v23 = vld [vmem:[#allocation2 + $0x8] sm:$0xff]
  %v24 = vld [vmem:[%s0] sm:$0xf]
  %v25 = vld [vmem:[%s0 + $0x4] sm:$0xf]
  %v26 = vld [vmem:[%s1] sm:$0xf]
  %v27 = vld [vmem:[%s1 + $0x4] sm:$0xf]
  %v28 = vld [vmem:[%s1 + $0x8] sm:$0xf]
  %v29 = vld [vmem:[%s1 + $0xc] sm:$0xf]
  %v32 = vunpack.c.l.b16 %v24
  %v33 = vunpack.c.l.b16 %v25
  %v34 = vpack.c.b16 %v33, %v32
  %v39 = vunpack.c.l.b16 %v26
  %v40 = vunpack.c.l.b16 %v27
  %v41 = vunpack.c.l.b16 %v28
  %v42 = vunpack.c.l.b16 %v29
  %v43 = vpack.c.b16 %v40, %v39
  %v44 = vpack.c.b16 %v42, %v41
  %vm47 = vcmask 261120
  %v49 = vsel %vm47, %v34, 0
  %51 = vmatprep.subr.bf16.mxu0 0
  %52 = vmatpush1.bf16.msra.mxu0 0
  %53 = vmatprep.subr.bf16.mxu0 0
  %54 = vmatpush1.bf16.msra.mxu0 0
  %55 = vmatprep.subr.bf16.mxu0 0
  %56 = vmatpush1.bf16.msra.mxu0 0
  %57 = vmatprep.subr.bf16.mxu0 0
  %58 = vmatpush1.bf16.msra.mxu0 0
  %59 = vmatprep.subr.bf16.mxu0 0
  %60 = vmatpush1.bf16.msra.mxu0 0
  %61 = vmatprep.subr.bf16.mxu0 0
  %62 = vmatpush1.bf16.msra.mxu0 0
  %63 = vmatprep.subr.bf16.mxu0 0
  %64 = vmatpush1.bf16.msra.mxu0 %v44
  %65 = vmatprep.subr.bf16.mxu0 0
  %66 = vmatpush1.bf16.msra.mxu0 %v43
  %67 = vmatprep.subr.bf16.mxu0 0
  %68 = vmatpush2.bf16.msra.mxu0 0
  %69 = vmatprep.subr.bf16.mxu0 0
  %70 = vmatpush2.bf16.msra.mxu0 0
  %71 = vmatprep.subr.bf16.mxu0 0
  %72 = vmatpush2.bf16.msra.mxu0 0
  %73 = vmatprep.subr.bf16.mxu0 0
  %74 = vmatpush2.bf16.msra.mxu0 0
  %75 = vmatprep.subr.bf16.mxu0 0
  %76 = vmatpush2.bf16.msra.mxu0 0
  %77 = vmatprep.subr.bf16.mxu0 0
  %78 = vmatpush2.bf16.msra.mxu0 0
  %79 = vmatprep.subr.bf16.mxu0 0
  %80 = vmatpush2.bf16.msra.mxu0 0
  %81 = vmatprep.subr.bf16.mxu0 0
  %82 = vmatpush2.bf16.msra.mxu0 0
  %83 = vmatprep.mubr.bf16.mxu0 0
  %84 = vmatmul.mubr.bf16.gmra.mxu0 %v49
  %v85 = vpop.f32.mrf.mxu0
  %v86 = vadd.f32 0.0, %v85
  %v87 = vpop.f32.mrf.mxu0
  %v88 = vpop.f32.mrf.mxu0
  %v89 = vadd.f32 0.0, %v88
  %v90 = vpop.f32.mrf.mxu0
  %91 = vdwg.mxu0
  %v92 = vadd.f32 %v22, %v86
  %v93 = vadd.f32 %v23, %v89
  %94 = vst.msk [vmem:[#allocation2] sm:$0xff] %vm47, %v92
  %95 = vst.msk [vmem:[#allocation2 + $0x8] sm:$0xff] %vm47, %v93
  // Predicated region
  $region18: #{decoder_forward.20} parent=0 // pred_check
    %p96 = pneg %p15
  $region19: #{decoder_forward.20} parent=0 // pred_check_branch
    %98 = sbr.rel (%p96) target = $region21
  $region20: #{decoder_forward.20} parent=0 // pred_region
    %v99 = vld [vmem:[#allocation2] sm:$0xff]
    %v100 = vld [vmem:[#allocation2 + $0x8] sm:$0xff]
    %v101 = vld [vmem:[%s2] sm:$0x1]
    %v103 = vlaneseq
    %v104 = vshrl.u32 %v103, 7
    %v105 = vsub.s32 0, %v104
    %v106 = vrot.slane %v101, %v105
    %v108 = vadd.f32 %v99, %v106
    %v109 = vadd.f32 %v100, %v106
    %v110 = vpack.c.bf16 %v109, %v108
    %v112 = vunpack.c.l.b16 %v110
    %v113 = vunpack.c.h.b16 %v110
    %v114 = vpack.c.b16 %v112, %v112
    %v115 = vpack.c.b16 %v113, %v113
    %vm118 = vcmask 257024
    %119 = vst.msk [vmem:[%s3] sm:$0xf] %vm118, %v114
    %120 = vst.msk [vmem:[%s3 + $0x4] sm:$0xf] %vm118, %v115
  $region21: #{decoder_forward.20} parent=0 // pred_fallthru
    _
  // Predicated region
  $region22: #{decoder_forward.20} parent=0 // pred_check
    _
  $region23: #{decoder_forward.20} parent=0 // pred_check_branch
    %122 = sbr.rel (0) target = $region25
  $region24: #{decoder_forward.20} parent=0 // pred_region
    _
  $region25: #{decoder_forward.20} parent=0 // pred_fallthru
    _
  // Predicated region
  $region26: #{decoder_forward.20} parent=0 // pred_check
    _
  $region27: #{decoder_forward.20} parent=0 // pred_check_branch
    %124 = sbr.rel (0) target = $region29
  $region28: #{decoder_forward.20} parent=0 // pred_region
    _
  $region29: #{decoder_forward.20} parent=0 // pred_fallthru
    _

// kernel: decoder_forward.19
$region0: #{decoder_forward.19}
  #allocation0 [shape = 'u32[]', space=smem, size = 0x4, offset = 0x4, fixed_abs, tag = 'smem constant byte address 0x4 - core index']
  #allocation1 [shape = 'u32[144,128]{1,0:T(1,128)}', space=vmem, size = 0x12000, scoped, tag = 'internal scratch']
  #allocation2 [shape = 'f32[16,32]{1,0:T(8,128)}', space=vmem, size = 0x2000, scoped, tag = 'scratch operand']
  %s0 = inlined_call_operand.vmem [shape: bf16[16,32], index: 0, kind: input, shape index: {}]
  %s1 = inlined_call_operand.vmem [shape: bf16[32,32], index: 1, kind: input, shape index: {}]
  %s2 = inlined_call_operand.vmem [shape: f32[1,32], index: 2, kind: input, shape index: {}]
  %s3 = inlined_call_operand.vmem [shape: bf16[16,32], index: 3, kind: input, shape index: {}]
  %s4 = inlined_call_operand.vmem [shape: f32[1,32], index: 4, kind: input, shape index: {}]
  %s5 = inlined_call_operand.vmem [shape: f32[1,32], index: 5, kind: input, shape index: {}]
  %s6 = inlined_call_operand.vmem [shape: bf16[16,32], index: 6, kind: output, shape index: {}]
  %s7 = sld [smem:[#allocation0]]
  $region42: #{decoder_forward.19} parent=0
    _
  %s9 = ssub.s32 1, %s7
  %s10 = scalar_select 0, %s9, %s7
  // Predicated region
  $region2: #{decoder_forward.19} parent=0 // pred_check
    _
  $region3: #{decoder_forward.19} parent=0 // pred_check_branch
    %12 = sbr.rel (0) target = $region5
  $region4: #{decoder_forward.19} parent=0 // pred_region
    _
  $region5: #{decoder_forward.19} parent=0 // pred_fallthru
    _
  // Predicated region
  $region6: #{decoder_forward.19} parent=0 // pred_check
    _
  $region7: #{decoder_forward.19} parent=0 // pred_check_branch
    %14 = sbr.rel (0) target = $region9
  $region8: #{decoder_forward.19} parent=0 // pred_region
    _
  $region9: #{decoder_forward.19} parent=0 // pred_fallthru
    _
  // Predicated region
  $region10: #{decoder_forward.19} parent=0 // pred_check
    _
  $region11: #{decoder_forward.19} parent=0 // pred_check_branch
    %16 = sbr.rel (0) target = $region13
  $region12: #{decoder_forward.19} parent=0 // pred_region
    _
  $region13: #{decoder_forward.19} parent=0 // pred_fallthru
    _
  // Predicated region
  $region14: #{decoder_forward.19} parent=0 // pred_check
    _
  $region15: #{decoder_forward.19} parent=0 // pred_check_branch
    %18 = sbr.rel (0) target = $region17
  $region16: #{decoder_forward.19} parent=0 // pred_region
    _
  $region17: #{decoder_forward.19} parent=0 // pred_fallthru
    _
  // Predicated region
  $region18: #{decoder_forward.19} parent=0 // pred_check
    _
  $region19: #{decoder_forward.19} parent=0 // pred_check_branch
    %20 = sbr.rel (0) target = $region21
  $region20: #{decoder_forward.19} parent=0 // pred_region
    _
  $region21: #{decoder_forward.19} parent=0 // pred_fallthru
    _
  // Predicated region
  $region22: #{decoder_forward.19} parent=0 // pred_check
    _
  $region23: #{decoder_forward.19} parent=0 // pred_check_branch
    %22 = sbr.rel (0) target = $region25
  $region24: #{decoder_forward.19} parent=0 // pred_region
    _
  $region25: #{decoder_forward.19} parent=0 // pred_fallthru
    _
  %p24 = scmp.eq.s32.totalorder 0, 0
  // Predicated region
  $region26: #{decoder_forward.19} parent=0 // pred_check
    %p25 = pneg %p24
  $region27: #{decoder_forward.19} parent=0 // pred_check_branch
    %27 = sbr.rel (%p25) target = $region29
  $region28: #{decoder_forward.19} parent=0 // pred_region
    %vm28 = vcmask 261120
    %29 = vst.msk [vmem:[#allocation2] sm:$0xff] %vm28, 0.0
    %30 = vst.msk [vmem:[#allocation2 + $0x8] sm:$0xff] %vm28, 0.0
  $region29: #{decoder_forward.19} parent=0 // pred_fallthru
    _
  %v31 = vld [vmem:[#allocation2] sm:$0xff]
  %v32 = vld [vmem:[#allocation2 + $0x8] sm:$0xff]
  %v33 = vld [vmem:[%s0] sm:$0xf]
  %v34 = vld [vmem:[%s0 + $0x4] sm:$0xf]
  %v35 = vld [vmem:[%s1] sm:$0xf]
  %v36 = vld [vmem:[%s1 + $0x4] sm:$0xf]
  %v37 = vld [vmem:[%s1 + $0x8] sm:$0xf]
  %v38 = vld [vmem:[%s1 + $0xc] sm:$0xf]
  %v41 = vunpack.c.l.b16 %v33
  %v42 = vunpack.c.l.b16 %v34
  %v43 = vpack.c.b16 %v42, %v41
  %v48 = vunpack.c.l.b16 %v35
  %v49 = vunpack.c.l.b16 %v36
  %v50 = vunpack.c.l.b16 %v37
  %v51 = vunpack.c.l.b16 %v38
  %v52 = vpack.c.b16 %v49, %v48
  %v53 = vpack.c.b16 %v51, %v50
  %vm56 = vcmask 261120
  %v58 = vsel %vm56, %v43, 0
  %60 = vmatprep.subr.bf16.mxu0 0
  %61 = vmatpush1.bf16.msra.mxu0 0
  %62 = vmatprep.subr.bf16.mxu0 0
  %63 = vmatpush1.bf16.msra.mxu0 0
  %64 = vmatprep.subr.bf16.mxu0 0
  %65 = vmatpush1.bf16.msra.mxu0 0
  %66 = vmatprep.subr.bf16.mxu0 0
  %67 = vmatpush1.bf16.msra.mxu0 0
  %68 = vmatprep.subr.bf16.mxu0 0
  %69 = vmatpush1.bf16.msra.mxu0 0
  %70 = vmatprep.subr.bf16.mxu0 0
  %71 = vmatpush1.bf16.msra.mxu0 0
  %72 = vmatprep.subr.bf16.mxu0 0
  %73 = vmatpush1.bf16.msra.mxu0 %v53
  %74 = vmatprep.subr.bf16.mxu0 0
  %75 = vmatpush1.bf16.msra.mxu0 %v52
  %76 = vmatprep.subr.bf16.mxu0 0
  %77 = vmatpush2.bf16.msra.mxu0 0
  %78 = vmatprep.subr.bf16.mxu0 0
  %79 = vmatpush2.bf16.msra.mxu0 0
  %80 = vmatprep.subr.bf16.mxu0 0
  %81 = vmatpush2.bf16.msra.mxu0 0
  %82 = vmatprep.subr.bf16.mxu0 0
  %83 = vmatpush2.bf16.msra.mxu0 0
  %84 = vmatprep.subr.bf16.mxu0 0
  %85 = vmatpush2.bf16.msra.mxu0 0
  %86 = vmatprep.subr.bf16.mxu0 0
  %87 = vmatpush2.bf16.msra.mxu0 0
  %88 = vmatprep.subr.bf16.mxu0 0
  %89 = vmatpush2.bf16.msra.mxu0 0
  %90 = vmatprep.subr.bf16.mxu0 0
  %91 = vmatpush2.bf16.msra.mxu0 0
  %92 = vmatprep.mubr.bf16.mxu0 0
  %93 = vmatmul.mubr.bf16.gmra.mxu0 %v58
  %v94 = vpop.f32.mrf.mxu0
  %v95 = vadd.f32 0.0, %v94
  %v96 = vpop.f32.mrf.mxu0
  %v97 = vpop.f32.mrf.mxu0
  %v98 = vadd.f32 0.0, %v97
  %v99 = vpop.f32.mrf.mxu0
  %100 = vdwg.mxu0
  %v101 = vadd.f32 %v31, %v95
  %v102 = vadd.f32 %v32, %v98
  %103 = vst.msk [vmem:[#allocation2] sm:$0xff] %vm56, %v101
  %104 = vst.msk [vmem:[#allocation2 + $0x8] sm:$0xff] %vm56, %v102
  // Predicated region
  $region30: #{decoder_forward.19} parent=0 // pred_check
    %p105 = pneg %p24
  $region31: #{decoder_forward.19} parent=0 // pred_check_branch
    %107 = sbr.rel (%p105) target = $region33
  $region32: #{decoder_forward.19} parent=0 // pred_region
    %v108 = vld [vmem:[#allocation2] sm:$0xff]
    %v109 = vld [vmem:[#allocation2 + $0x8] sm:$0xff]
    %v110 = vld [vmem:[%s2] sm:$0x1]
    %v112 = vlaneseq
    %v113 = vshrl.u32 %v112, 7
    %v114 = vsub.s32 0, %v113
    %v115 = vrot.slane %v110, %v114
    %v117 = vadd.f32 %v108, %v115
    %v118 = vadd.f32 %v109, %v115
    %v119 = vld [vmem:[%s3] sm:$0xf]
    %v120 = vld [vmem:[%s3 + $0x4] sm:$0xf]
    %v121 = vunpack.c.l.bf16 %v119
    %v122 = vunpack.c.l.bf16 %v120
    %v123 = vadd.f32 %v117, %v121
    %v124 = vadd.f32 %v118, %v122
    %v125 = vsel %vm56, %v123, 0.0
    %126 = vadd.xlane.f32.xlu0 %v125
    %v127 = vpop.xlane.xlu0 %126
    %v128 = vsel %vm56, %v124, 0.0
    %129 = vadd.xlane.f32.xlu0 %v128
    %v130 = vpop.xlane.xlu0 %129
    %v131 = vrcp.pop 32.0
    %v132 = vmul.f32 %v127, %v131
    %v133 = vmul.f32 %v130, %v131
    %v134 = vsub.f32 %v123, %v132
    %v135 = vsub.f32 %v124, %v133
    %v136 = vmul.f32 %v134, %v134
    %v137 = vmul.f32 %v135, %v135
    %v138 = vsel %vm56, %v136, 0.0
    %139 = vadd.xlane.f32.xlu0 %v138
    %v140 = vpop.xlane.xlu0 %139
    %v141 = vsel %vm56, %v137, 0.0
    %142 = vadd.xlane.f32.xlu0 %v141
    %v143 = vpop.xlane.xlu0 %142
    %v144 = vmul.f32 %v140, %v131
    %v145 = vmul.f32 %v143, %v131
    %v146 = vadd.f32 %v144, 1e-12
    %v147 = vadd.f32 %v145, 1e-12
    %v148 = vrsqrt.pop %v146
    %v149 = vrsqrt.pop %v147
    %v150 = vmul.f32 %v134, %v148
    %v151 = vmul.f32 %v135, %v149
    %v152 = vld [vmem:[%s4] sm:$0x1]
    %v154 = vlaneseq
    %v155 = vshrl.u32 %v154, 7
    %v156 = vsub.s32 0, %v155
    %v157 = vrot.slane %v152, %v156
    %v159 = vmul.f32 %v150, %v157
    %v160 = vmul.f32 %v151, %v157
    %v161 = vld [vmem:[%s5] sm:$0x1]
    %v163 = vlaneseq
    %v164 = vshrl.u32 %v163, 7
    %v165 = vsub.s32 0, %v164
    %v166 = vrot.slane %v161, %v165
    %v168 = vadd.f32 %v159, %v166
    %v169 = vadd.f32 %v160, %v166
    %v170 = vpack.c.bf16 %v169, %v168
    %v172 = vunpack.c.l.b16 %v170
    %v173 = vunpack.c.h.b16 %v170
    %v174 = vpack.c.b16 %v172, %v172
    %v175 = vpack.c.b16 %v173, %v173
    %vm178 = vcmask 257024
    %179 = vst.msk [vmem:[%s6] sm:$0xf] %vm178, %v174
    %180 = vst.msk [vmem:[%s6 + $0x4] sm:$0xf] %vm178, %v175
  $region33: #{decoder_forward.19} parent=0 // pred_fallthru
    _
  // Predicated region
  $region34: #{decoder_forward.19} parent=0 // pred_check
    _
  $region35: #{decoder_forward.19} parent=0 // pred_check_branch
    %182 = sbr.rel (0) target = $region37
  $region36: #{decoder_forward.19} parent=0 // pred_region
    _
  $region37: #{decoder_forward.19} parent=0 // pred_fallthru
    _
  // Predicated region
  $region38: #{decoder_forward.19} parent=0 // pred_check
    _
  $region39: #{decoder_forward.19} parent=0 // pred_check_branch
    %184 = sbr.rel (0) target = $region41
  $region40: #{decoder_forward.19} parent=0 // pred_region
    _
  $region41: #{decoder_forward.19} parent=0 // pred_fallthru
    _

// kernel: decoder_forward.18
$region0: #{decoder_forward.18}
  #allocation0 [shape = 'u32[]', space=smem, size = 0x4, offset = 0x4, fixed_abs, tag = 'smem constant byte address 0x4 - core index']
  #allocation1 [shape = 'u32[144,128]{1,0:T(1,128)}', space=vmem, size = 0x12000, scoped, tag = 'internal scratch']
  #allocation2 [shape = 'f32[4,8,1]{2,1,0:T(8,128)}', space=vmem, size = 0x4000, scoped, tag = 'scratch operand']
  #allocation3 [shape = 'f32[4,8,1]{2,1,0:T(8,128)}', space=vmem, size = 0x4000, scoped, tag = 'scratch operand']
  #allocation4 [shape = 'f32[4,8,8]{2,1,0:T(8,128)}', space=vmem, size = 0x4000, scoped, tag = 'scratch operand']
  %s0 = inlined_call_operand.vmem [shape: bf16[2,4,8,8], index: 0, kind: input, shape index: {}]
  %s1 = inlined_call_operand.vmem [shape: bf16[2,4,8,8], index: 1, kind: input, shape index: {}]
  %s2 = inlined_call_operand.vmem [shape: bf16[2,4,8,8], index: 2, kind: input, shape index: {}]
  %s3 = inlined_call_operand.vmem [shape: f32[2,8,8], index: 3, kind: input, shape index: {}]
  %s4 = inlined_call_operand.vmem [shape: bf16[2,4,8,8], index: 4, kind: output, shape index: {}]
  %s5 = sld [smem:[#allocation0]]
  $region57: #{decoder_forward.18} parent=0
    _
  %s7 = ssub.s32 1, %s5
  %s8 = scalar_select 0, %s7, %s5
  loop: start=0, step=1, limit=4
  $region2: #{decoder_forward.18} parent=0 // loop_pre_header
    _
  $region3: #{decoder_forward.18} parent=0 // loop_header
    %s10 = sphi 0, %s14
    %p11 = scmp.ge.s32.totalorder %s10, 4
    %s17 = sphi 0, %s29
    %s18 = sphi 0, %s25
    %s19 = sphi 0, %s17
    %s20 = sphi 0, %s18
    %s21 = sphi 0, %s19
    %s22 = sphi 0, %s20
    %s32 = sphi 0, %s34
    %s35 = sphi 0, %s32
    %s36 = sphi 0, %s35
    %s52 = sphi 0, %s36
    %s60 = sphi 0, %s62
    %s63 = sphi 0, %s60
    %s64 = sphi 0, %s63
    %s80 = sphi 0, %s64
    %s88 = sphi 0, %s90
    %s91 = sphi 0, %s88
    %s92 = sphi 0, %s91
    %s108 = sphi 0, %s92
    %s116 = sphi 0, %s118
    %s119 = sphi 0, %s116
    %s120 = sphi 0, %s119
    %s136 = sphi 0, %s120
    %s142 = sphi 0, %s144
    %s145 = sphi 0, %s142
    %s146 = sphi 0, %s145
    %s162 = sphi 0, %s146
  $region4: #{decoder_forward.18} parent=0 // loop_header_branch
    %13 = sbr.rel (%p11) target = $region8
  $region5: #{decoder_forward.18} parent=0 // loop_body
    %s15 = ssub.s32 %s10, 1
    %s16 = ssub.s32 %s10, 2
    %s23 = sadd.s32 1, %s18
    %p24 = scmp.ge.s32.totalorder %s23, 1
    %s25 = scalar_select %p24, 0, %s23
    %s26 = sadd.s32 1, %s17
    %s27 = scalar_select %p24, %s26, %s17
    %p28 = scmp.ge.s32.totalorder %s27, 2
    %s29 = scalar_select %p28, 0, %s27
    %s30 = ssub.s32 %s17, %s29
    %p31 = scmp.eq.s32.totalorder %s30, 0
    %s33 = sadd.s32 %s32, 1
    %s34 = scalar_select %p31, %s32, %s33
    %p37 = pneg %p31
    %p38 = scmp.eq.s32.totalorder %s10, 1
    %p39 = por %p37, %p38
    %p40 = scmp.ne.s32.totalorder %s32, %s35
    %p41 = scmp.eq.s32.totalorder %s10, 0
    %p42 = por %p40, %p41
    %p43 = scmp.ne.s32.totalorder %s32, %s35
    %p44 = scmp.eq.s32.totalorder %s15, 1
    %p45 = por %p43, %p44
    %p46 = scmp.ne.s32.totalorder %s35, %s36
    %p47 = scmp.eq.s32.totalorder %s15, 0
    %p48 = por %p46, %p47
    %p49 = scmp.ne.s32.totalorder %s35, %s36
    %p50 = scmp.eq.s32.totalorder %s16, 1
    %p51 = por %p49, %p50
    %p53 = scmp.ne.s32.totalorder %s36, %s52
    %p54 = scmp.eq.s32.totalorder %s16, 0
    %p55 = por %p53, %p54
    %s56 = ssub.s32 %s17, %s29
    %s57 = ssub.s32 %s18, %s25
    %s58 = sor.u32 %s56, %s57
    %p59 = scmp.eq.s32.totalorder %s58, 0
    %s61 = sadd.s32 %s60, 1
    %s62 = scalar_select %p59, %s60, %s61
    %p65 = pneg %p59
    %p66 = scmp.eq.s32.totalorder %s10, 1
    %p67 = por %p65, %p66
    %p68 = scmp.ne.s32.totalorder %s60, %s63
    %p69 = scmp.eq.s32.totalorder %s10, 0
    %p70 = por %p68, %p69
    %p71 = scmp.ne.s32.totalorder %s60, %s63
    %p72 = scmp.eq.s32.totalorder %s15, 1
    %p73 = por %p71, %p72
    %p74 = scmp.ne.s32.totalorder %s63, %s64
    %p75 = scmp.eq.s32.totalorder %s15, 0
    %p76 = por %p74, %p75
    %p77 = scmp.ne.s32.totalorder %s63, %s64
    %p78 = scmp.eq.s32.totalorder %s16, 1
    %p79 = por %p77, %p78
    %p81 = scmp.ne.s32.totalorder %s64, %s80
    %p82 = scmp.eq.s32.totalorder %s16, 0
    %p83 = por %p81, %p82
    %s84 = ssub.s32 %s17, %s29
    %s85 = ssub.s32 %s18, %s25
    %s86 = sor.u32 %s84, %s85
    %p87 = scmp.eq.s32.totalorder %s86, 0
    %s89 = sadd.s32 %s88, 1
    %s90 = scalar_select %p87, %s88, %s89
    %p93 = pneg %p87
    %p94 = scmp.eq.s32.totalorder %s10, 1
    %p95 = por %p93, %p94
    %p96 = scmp.ne.s32.totalorder %s88, %s91
    %p97 = scmp.eq.s32.totalorder %s10, 0
    %p98 = por %p96, %p97
    %p99 = scmp.ne.s32.totalorder %s88, %s91
    %p100 = scmp.eq.s32.totalorder %s15, 1
    %p101 = por %p99, %p100
    %p102 = scmp.ne.s32.totalorder %s91, %s92
    %p103 = scmp.eq.s32.totalorder %s15, 0
    %p104 = por %p102, %p103
    %p105 = scmp.ne.s32.totalorder %s91, %s92
    %p106 = scmp.eq.s32.totalorder %s16, 1
    %p107 = por %p105, %p106
    %p109 = scmp.ne.s32.totalorder %s92, %s108
    %p110 = scmp.eq.s32.totalorder %s16, 0
    %p111 = por %p109, %p110
    %s112 = ssub.s32 %s17, %s29
    %s113 = ssub.s32 %s18, %s25
    %s114 = sor.u32 %s112, %s113
    %p115 = scmp.eq.s32.totalorder %s114, 0
    %s117 = sadd.s32 %s116, 1
    %s118 = scalar_select %p115, %s116, %s117
    %p121 = pneg %p115
    %p122 = scmp.eq.s32.totalorder %s10, 1
    %p123 = por %p121, %p122
    %p124 = scmp.ne.s32.totalorder %s116, %s119
    %p125 = scmp.eq.s32.totalorder %s10, 0
    %p126 = por %p124, %p125
    %p127 = scmp.ne.s32.totalorder %s116, %s119
    %p128 = scmp.eq.s32.totalorder %s15, 1
    %p129 = por %p127, %p128
    %p130 = scmp.ne.s32.totalorder %s119, %s120
    %p131 = scmp.eq.s32.totalorder %s15, 0
    %p132 = por %p130, %p131
    %p133 = scmp.ne.s32.totalorder %s119, %s120
    %p134 = scmp.eq.s32.totalorder %s16, 1
    %p135 = por %p133, %p134
    %p137 = scmp.ne.s32.totalorder %s120, %s136
    %p138 = scmp.eq.s32.totalorder %s16, 0
    %p139 = por %p137, %p138
    %s140 = ssub.s32 %s17, %s29
    %p141 = scmp.eq.s32.totalorder %s140, 0
    %s143 = sadd.s32 %s142, 1
    %s144 = scalar_select %p141, %s142, %s143
    %p147 = pneg %p141
    %p148 = scmp.eq.s32.totalorder %s10, 1
    %p149 = por %p147, %p148
    %p150 = scmp.ne.s32.totalorder %s142, %s145
    %p151 = scmp.eq.s32.totalorder %s10, 0
    %p152 = por %p150, %p151
    %p153 = scmp.ne.s32.totalorder %s142, %s145
    %p154 = scmp.eq.s32.totalorder %s15, 1
    %p155 = por %p153, %p154
    %p156 = scmp.ne.s32.totalorder %s145, %s146
    %p157 = scmp.eq.s32.totalorder %s15, 0
    %p158 = por %p156, %p157
    %p159 = scmp.ne.s32.totalorder %s145, %s146
    %p160 = scmp.eq.s32.totalorder %s16, 1
    %p161 = por %p159, %p160
    %p163 = scmp.ne.s32.totalorder %s146, %s162
    %p164 = scmp.eq.s32.totalorder %s16, 0
    %p165 = por %p163, %p164
    %p166 = scmp.le.s32.totalorder 1, %s10
    %p167 = scmp.lt.s32.totalorder %s10, 3
    %p168 = pnand %p166, %p167
    %p169 = pneg %p168
    // Predicated region
    $region9: #{decoder_forward.18} parent=5 // pred_check
      _
    $region10: #{decoder_forward.18} parent=5 // pred_check_branch
      %171 = sbr.rel (%p168) target = $region12
    $region11: #{decoder_forward.18} parent=5 // pred_region
      %s172 = ssub.s32 %s10, 1
    $region12: #{decoder_forward.18} parent=5 // pred_fallthru
      _
    %p173 = scmp.lt.s32.totalorder %s10, 2
    // Predicated region
    $region13: #{decoder_forward.18} parent=5 // pred_check
      %p174 = pneg %p173
    $region14: #{decoder_forward.18} parent=5 // pred_check_branch
      %176 = sbr.rel (%p174) target = $region16
    $region15: #{decoder_forward.18} parent=5 // pred_region
      // Predicated region
      $region17: #{decoder_forward.18} parent=15 // pred_check
        %p177 = pneg %p42
      $region18: #{decoder_forward.18} parent=15 // pred_check_branch
        %179 = sbr.rel (%p177) target = $region20
      $region19: #{decoder_forward.18} parent=15 // pred_region
        %p180 = scmp.lt.s32.totalorder %s17, 1
        %s181 = scalar_select %p180, %s17, 1
        %s182 = smul.addr %s181, 4
        %s183 = smul.addr %s182, 4
        %s184 = scalar_lea.vmem %s0, %s183
      $region20: #{decoder_forward.18} parent=15 // pred_fallthru
        _
      // Predicated region
      $region21: #{decoder_forward.18} parent=15 // pred_check
        %p185 = pneg %p70
      $region22: #{decoder_forward.18} parent=15 // pred_check_branch
        %187 = sbr.rel (%p185) target = $region24
      $region23: #{decoder_forward.18} parent=15 // pred_region
        %p188 = scmp.lt.s32.totalorder %s17, 1
        %s189 = scalar_select %p188, %s17, 1
        %p190 = scmp.lt.s32.totalorder %s18, 0
        %s191 = scalar_select %p190, %s18, 0
        %s192 = smul.addr %s189, 4
        %s193 = sadd.s32 %s191, %s192
        %s194 = smul.addr %s193, 4
        %s195 = scalar_lea.vmem %s1, %s194
      $region24: #{decoder_forward.18} parent=15 // pred_fallthru
        _
      // Predicated region
      $region25: #{decoder_forward.18} parent=15 // pred_check
        %p196 = pneg %p98
      $region26: #{decoder_forward.18} parent=15 // pred_check_branch
        %198 = sbr.rel (%p196) target = $region28
      $region27: #{decoder_forward.18} parent=15 // pred_region
        %p199 = scmp.lt.s32.totalorder %s17, 1
        %s200 = scalar_select %p199, %s17, 1
        %p201 = scmp.lt.s32.totalorder %s18, 0
        %s202 = scalar_select %p201, %s18, 0
        %s203 = smul.addr %s200, 4
        %s204 = sadd.s32 %s202, %s203
        %s205 = smul.addr %s204, 4
        %s206 = scalar_lea.vmem %s2, %s205
      $region28: #{decoder_forward.18} parent=15 // pred_fallthru
        _
      // Predicated region
      $region29: #{decoder_forward.18} parent=15 // pred_check
        %p207 = pneg %p126
      $region30: #{decoder_forward.18} parent=15 // pred_check_branch
        %209 = sbr.rel (%p207) target = $region32
      $region31: #{decoder_forward.18} parent=15 // pred_region
        %p210 = scmp.lt.s32.totalorder %s17, 1
        %s211 = scalar_select %p210, %s17, 1
        %p212 = scmp.lt.s32.totalorder %s18, 0
        %s213 = scalar_select %p212, %s18, 0
        %s214 = sadd.s32 %s213, %s211
        %s215 = smul.addr %s214, 8
        %s216 = scalar_lea.vmem %s3, %s215
      $region32: #{decoder_forward.18} parent=15 // pred_fallthru
        _
    $region16: #{decoder_forward.18} parent=5 // pred_fallthru
      _
    %p217 = scmp.le.s32.totalorder 1, %s10
    %p218 = scmp.lt.s32.totalorder %s10, 3
    %p219 = pnand %p217, %p218
    %p220 = pneg %p219
    // Predicated region
    $region33: #{decoder_forward.18} parent=5 // pred_check
      _
    $region34: #{decoder_forward.18} parent=5 // pred_check_branch
      %222 = sbr.rel (%p219) target = $region36
    $region35: #{decoder_forward.18} parent=5 // pred_region
      %s223 = ssub.s32 %s10, 1
      %p224 = scmp.lt.s32.totalorder %s19, 1
      %s225 = scalar_select %p224, %s19, 1
      %s226 = smul.addr %s225, 4
      %s227 = smul.addr %s226, 4
      %s228 = scalar_lea.vmem %s0, %s227
      %p229 = pneg %p48
      %p230 = pneg %p45
      %p231 = scmp.lt.s32.totalorder %s19, 1
      %s232 = scalar_select %p231, %s19, 1
      %p233 = scmp.lt.s32.totalorder %s20, 0
      %s234 = scalar_select %p233, %s20, 0
      %s235 = smul.addr %s232, 4
      %s236 = sadd.s32 %s234, %s235
      %s237 = smul.addr %s236, 4
      %s238 = scalar_lea.vmem %s1, %s237
      %p239 = pneg %p76
      %p240 = pneg %p73
      %p241 = scmp.lt.s32.totalorder %s19, 1
      %s242 = scalar_select %p241, %s19, 1
      %p243 = scmp.lt.s32.totalorder %s20, 0
      %s244 = scalar_select %p243, %s20, 0
      %s245 = smul.addr %s242, 4
      %s246 = sadd.s32 %s244, %s245
      %s247 = smul.addr %s246, 4
      %s248 = scalar_lea.vmem %s2, %s247
      %p249 = pneg %p104
      %p250 = pneg %p101
      %p251 = scmp.lt.s32.totalorder %s19, 1
      %s252 = scalar_select %p251, %s19, 1
      %p253 = scmp.lt.s32.totalorder %s20, 0
      %s254 = scalar_select %p253, %s20, 0
      %s255 = sadd.s32 %s254, %s252
      %s256 = smul.addr %s255, 8
      %s257 = scalar_lea.vmem %s3, %s256
      %p258 = pneg %p132
      %p259 = pneg %p129
      %p260 = pneg %p158
      %p261 = pneg %p155
      %p262 = scmp.lt.s32.totalorder %s19, 1
      %s263 = scalar_select %p262, %s19, 1
      %s264 = smul.addr %s263, 4
      %s265 = smul.addr %s264, 4
      %s266 = scalar_lea.vmem %s4, %s265
      %p267 = scmp.lt.s32.totalorder %s19, 1
      %s268 = scalar_select %p267, %s19, 1
      %s269 = smul.addr %s268, 4
      %s270 = smul.addr %s269, 4
      %s271 = scalar_lea.vmem %s0, %s270
      %p272 = scmp.lt.s32.totalorder %s19, 1
      %s273 = scalar_select %p272, %s19, 1
      %p274 = scmp.lt.s32.totalorder %s20, 0
      %s275 = scalar_select %p274, %s20, 0
      %s276 = smul.addr %s273, 4
      %s277 = sadd.s32 %s275, %s276
      %s278 = smul.addr %s277, 4
      %s279 = scalar_lea.vmem %s1, %s278
      %p280 = scmp.lt.s32.totalorder %s19, 1
      %s281 = scalar_select %p280, %s19, 1
      %p282 = scmp.lt.s32.totalorder %s20, 0
      %s283 = scalar_select %p282, %s20, 0
      %s284 = smul.addr %s281, 4
      %s285 = sadd.s32 %s283, %s284
      %s286 = smul.addr %s285, 4
      %s287 = scalar_lea.vmem %s2, %s286
      %p288 = scmp.lt.s32.totalorder %s19, 1
      %s289 = scalar_select %p288, %s19, 1
      %p290 = scmp.lt.s32.totalorder %s20, 0
      %s291 = scalar_select %p290, %s20, 0
      %s292 = sadd.s32 %s291, %s289
      %s293 = smul.addr %s292, 8
      %s294 = scalar_lea.vmem %s3, %s293
      %p295 = scmp.lt.s32.totalorder %s19, 1
      %s296 = scalar_select %p295, %s19, 1
      %s297 = smul.addr %s296, 4
      %s298 = smul.addr %s297, 4
      %s299 = scalar_lea.vmem %s4, %s298
      %p301 = scmp.eq.s32.totalorder %s20, 0
      // Predicated region
      $region37: #{decoder_forward.18} parent=35 // pred_check
        %p302 = pneg %p301
      $region38: #{decoder_forward.18} parent=35 // pred_check_branch
        %304 = sbr.rel (%p302) target = $region40
      $region39: #{decoder_forward.18} parent=35 // pred_region
        %vm305 = vcmask 7168
        %306 = vst.msk [vmem:[#allocation2] sm:$0xff] %vm305, -inf
        %307 = vst.msk [vmem:[#allocation2 + $0x8] sm:$0xff] %vm305, -inf
        %308 = vst.msk [vmem:[#allocation2 + $0x10] sm:$0xff] %vm305, -inf
        %309 = vst.msk [vmem:[#allocation2 + $0x18] sm:$0xff] %vm305, -inf
        %310 = vst.msk [vmem:[#allocation3] sm:$0xff] %vm305, 0.0
        %311 = vst.msk [vmem:[#allocation3 + $0x8] sm:$0xff] %vm305, 0.0
        %312 = vst.msk [vmem:[#allocation3 + $0x10] sm:$0xff] %vm305, 0.0
        %313 = vst.msk [vmem:[#allocation3 + $0x18] sm:$0xff] %vm305, 0.0
        %vm314 = vcmask 64512
        %315 = vst.msk [vmem:[#allocation4] sm:$0xff] %vm314, 0.0
        %316 = vst.msk [vmem:[#allocation4 + $0x8] sm:$0xff] %vm314, 0.0
        %317 = vst.msk [vmem:[#allocation4 + $0x10] sm:$0xff] %vm314, 0.0
        %318 = vst.msk [vmem:[#allocation4 + $0x18] sm:$0xff] %vm314, 0.0
      $region40: #{decoder_forward.18} parent=35 // pred_fallthru
        _
      %v319 = vld [vmem:[%s271] sm:$0xf]
      %v320 = vld [vmem:[%s271 + $0x4] sm:$0xf]
      %v321 = vld [vmem:[%s271 + $0x8] sm:$0xf]
      %v322 = vld [vmem:[%s271 + $0xc] sm:$0xf]
      %v323 = vld [vmem:[%s279] sm:$0xf]
      %v324 = vld [vmem:[%s279 + $0x4] sm:$0xf]
      %v325 = vld [vmem:[%s279 + $0x8] sm:$0xf]
      %v326 = vld [vmem:[%s279 + $0xc] sm:$0xf]
      %v327 = vld [vmem:[%s287] sm:$0xf]
      %v328 = vld [vmem:[%s287 + $0x4] sm:$0xf]
      %v329 = vld [vmem:[%s287 + $0x8] sm:$0xf]
      %v330 = vld [vmem:[%s287 + $0xc] sm:$0xf]
      %v331 = vld [vmem:[%s294] sm:$0xff]
      %vm332 = vcmask 64512
      %v334 = vsel %vm332, %v319, 0
      %v337 = vsel %vm332, %v323, 0
      %339 = vmatprep.subr.bf16.mxu0 0
      %340 = vmatpush1.bf16.xpose.msra.mxu0 0
      %341 = vmatprep.subr.bf16.mxu0 0
      %342 = vmatpush1.bf16.xpose.msra.mxu0 0
      %343 = vmatprep.subr.bf16.mxu0 0
      %344 = vmatpush1.bf16.xpose.msra.mxu0 0
      %345 = vmatprep.subr.bf16.mxu0 0
      %346 = vmatpush1.bf16.xpose.msra.mxu0 0
      %347 = vmatprep.subr.bf16.mxu0 0
      %348 = vmatpush1.bf16.xpose.msra.mxu0 0
      %349 = vmatprep.subr.bf16.mxu0 0
      %350 = vmatpush1.bf16.xpose.msra.mxu0 0
      %351 = vmatprep.subr.bf16.mxu0 0
      %352 = vmatpush1.bf16.xpose.msra.mxu0 0
      %353 = vmatprep.subr.bf16.mxu0 0
      %354 = vmatpush1.bf16.xpose.msra.mxu0 %v337
      %355 = vmatprep.subr.bf16.mxu0 0
      %356 = vmatpush2.bf16.xpose.msra.mxu0 0
      %357 = vmatprep.subr.bf16.mxu0 0
      %358 = vmatpush2.bf16.xpose.msra.mxu0 0
      %359 = vmatprep.subr.bf16.mxu0 0
      %360 = vmatpush2.bf16.xpose.msra.mxu0 0
      %361 = vmatprep.subr.bf16.mxu0 0
      %362 = vmatpush2.bf16.xpose.msra.mxu0 0
      %363 = vmatprep.subr.bf16.mxu0 0
      %364 = vmatpush2.bf16.xpose.msra.mxu0 0
      %365 = vmatprep.subr.bf16.mxu0 0
      %366 = vmatpush2.bf16.xpose.msra.mxu0 0
      %367 = vmatprep.subr.bf16.mxu0 0
      %368 = vmatpush2.bf16.xpose.msra.mxu0 0
      %369 = vmatprep.subr.bf16.mxu0 0
      %370 = vmatpush2.bf16.xpose.msra.mxu0 0
      %371 = vmatprep.mubr.bf16.mxu0 0
      %372 = vmatmul.mubr.bf16.gmra.mxu0 %v334
      %v373 = vpop.f32.mrf.mxu0
      %v374 = vadd.f32 0.0, %v373
      %v375 = vpop.f32.mrf.mxu0
      %v376 = vpop.f32.mrf.mxu0
      %v377 = vpop.f32.mrf.mxu0
      %378 = vdwg.mxu0
      %v380 = vsel %vm332, %v320, 0
      %v383 = vsel %vm332, %v324, 0
      %385 = vmatprep.subr.bf16.mxu0 0
      %386 = vmatpush1.bf16.xpose.msra.mxu0 0
      %387 = vmatprep.subr.bf16.mxu0 0
      %388 = vmatpush1.bf16.xpose.msra.mxu0 0
      %389 = vmatprep.subr.bf16.mxu0 0
      %390 = vmatpush1.bf16.xpose.msra.mxu0 0
      %391 = vmatprep.subr.bf16.mxu0 0
      %392 = vmatpush1.bf16.xpose.msra.mxu0 0
      %393 = vmatprep.subr.bf16.mxu0 0
      %394 = vmatpush1.bf16.xpose.msra.mxu0 0
      %395 = vmatprep.subr.bf16.mxu0 0
      %396 = vmatpush1.bf16.xpose.msra.mxu0 0
      %397 = vmatprep.subr.bf16.mxu0 0
      %398 = vmatpush1.bf16.xpose.msra.mxu0 0
      %399 = vmatprep.subr.bf16.mxu0 0
      %400 = vmatpush1.bf16.xpose.msra.mxu0 %v383
      %401 = vmatprep.subr.bf16.mxu0 0
      %402 = vmatpush2.bf16.xpose.msra.mxu0 0
      %403 = vmatprep.subr.bf16.mxu0 0
      %404 = vmatpush2.bf16.xpose.msra.mxu0 0
      %405 = vmatprep.subr.bf16.mxu0 0
      %406 = vmatpush2.bf16.xpose.msra.mxu0 0
      %407 = vmatprep.subr.bf16.mxu0 0
      %408 = vmatpush2.bf16.xpose.msra.mxu0 0
      %409 = vmatprep.subr.bf16.mxu0 0
      %410 = vmatpush2.bf16.xpose.msra.mxu0 0
      %411 = vmatprep.subr.bf16.mxu0 0
      %412 = vmatpush2.bf16.xpose.msra.mxu0 0
      %413 = vmatprep.subr.bf16.mxu0 0
      %414 = vmatpush2.bf16.xpose.msra.mxu0 0
      %415 = vmatprep.subr.bf16.mxu0 0
      %416 = vmatpush2.bf16.xpose.msra.mxu0 0
      %417 = vmatprep.mubr.bf16.mxu0 0
      %418 = vmatmul.mubr.bf16.gmra.mxu0 %v380
      %v419 = vpop.f32.mrf.mxu0
      %v420 = vadd.f32 0.0, %v419
      %v421 = vpop.f32.mrf.mxu0
      %v422 = vpop.f32.mrf.mxu0
      %v423 = vpop.f32.mrf.mxu0
      %424 = vdwg.mxu0
      %v426 = vsel %vm332, %v321, 0
      %v429 = vsel %vm332, %v325, 0
      %431 = vmatprep.subr.bf16.mxu0 0
      %432 = vmatpush1.bf16.xpose.msra.mxu0 0
      %433 = vmatprep.subr.bf16.mxu0 0
      %434 = vmatpush1.bf16.xpose.msra.mxu0 0
      %435 = vmatprep.subr.bf16.mxu0 0
      %436 = vmatpush1.bf16.xpose.msra.mxu0 0
      %437 = vmatprep.subr.bf16.mxu0 0
      %438 = vmatpush1.bf16.xpose.msra.mxu0 0
      %439 = vmatprep.subr.bf16.mxu0 0
      %440 = vmatpush1.bf16.xpose.msra.mxu0 0
      %441 = vmatprep.subr.bf16.mxu0 0
      %442 = vmatpush1.bf16.xpose.msra.mxu0 0
      %443 = vmatprep.subr.bf16.mxu0 0
      %444 = vmatpush1.bf16.xpose.msra.mxu0 0
      %445 = vmatprep.subr.bf16.mxu0 0
      %446 = vmatpush1.bf16.xpose.msra.mxu0 %v429
      %447 = vmatprep.subr.bf16.mxu0 0
      %448 = vmatpush2.bf16.xpose.msra.mxu0 0
      %449 = vmatprep.subr.bf16.mxu0 0
      %450 = vmatpush2.bf16.xpose.msra.mxu0 0
      %451 = vmatprep.subr.bf16.mxu0 0
      %452 = vmatpush2.bf16.xpose.msra.mxu0 0
      %453 = vmatprep.subr.bf16.mxu0 0
      %454 = vmatpush2.bf16.xpose.msra.mxu0 0
      %455 = vmatprep.subr.bf16.mxu0 0
      %456 = vmatpush2.bf16.xpose.msra.mxu0 0
      %457 = vmatprep.subr.bf16.mxu0 0
      %458 = vmatpush2.bf16.xpose.msra.mxu0 0
      %459 = vmatprep.subr.bf16.mxu0 0
      %460 = vmatpush2.bf16.xpose.msra.mxu0 0
      %461 = vmatprep.subr.bf16.mxu0 0
      %462 = vmatpush2.bf16.xpose.msra.mxu0 0
      %463 = vmatprep.mubr.bf16.mxu0 0
      %464 = vmatmul.mubr.bf16.gmra.mxu0 %v426
      %v465 = vpop.f32.mrf.mxu0
      %v466 = vadd.f32 0.0, %v465
      %v467 = vpop.f32.mrf.mxu0
      %v468 = vpop.f32.mrf.mxu0
      %v469 = vpop.f32.mrf.mxu0
      %470 = vdwg.mxu0
      %v472 = vsel %vm332, %v322, 0
      %v475 = vsel %vm332, %v326, 0
      %477 = vmatprep.subr.bf16.mxu0 0
      %478 = vmatpush1.bf16.xpose.msra.mxu0 0
      %479 = vmatprep.subr.bf16.mxu0 0
      %480 = vmatpush1.bf16.xpose.msra.mxu0 0
      %481 = vmatprep.subr.bf16.mxu0 0
      %482 = vmatpush1.bf16.xpose.msra.mxu0 0
      %483 = vmatprep.subr.bf16.mxu0 0
      %484 = vmatpush1.bf16.xpose.msra.mxu0 0
      %485 = vmatprep.subr.bf16.mxu0 0
      %486 = vmatpush1.bf16.xpose.msra.mxu0 0
      %487 = vmatprep.subr.bf16.mxu0 0
      %488 = vmatpush1.bf16.xpose.msra.mxu0 0
      %489 = vmatprep.subr.bf16.mxu0 0
      %490 = vmatpush1.bf16.xpose.msra.mxu0 0
      %491 = vmatprep.subr.bf16.mxu0 0
      %492 = vmatpush1.bf16.xpose.msra.mxu0 %v475
      %493 = vmatprep.subr.bf16.mxu0 0
      %494 = vmatpush2.bf16.xpose.msra.mxu0 0
      %495 = vmatprep.subr.bf16.mxu0 0
      %496 = vmatpush2.bf16.xpose.msra.mxu0 0
      %497 = vmatprep.subr.bf16.mxu0 0
      %498 = vmatpush2.bf16.xpose.msra.mxu0 0
      %499 = vmatprep.subr.bf16.mxu0 0
      %500 = vmatpush2.bf16.xpose.msra.mxu0 0
      %501 = vmatprep.subr.bf16.mxu0 0
      %502 = vmatpush2.bf16.xpose.msra.mxu0 0
      %503 = vmatprep.subr.bf16.mxu0 0
      %504 = vmatpush2.bf16.xpose.msra.mxu0 0
      %505 = vmatprep.subr.bf16.mxu0 0
      %506 = vmatpush2.bf16.xpose.msra.mxu0 0
      %507 = vmatprep.subr.bf16.mxu0 0
      %508 = vmatpush2.bf16.xpose.msra.mxu0 0
      %509 = vmatprep.mubr.bf16.mxu0 0
      %510 = vmatmul.mubr.bf16.gmra.mxu0 %v472
      %v511 = vpop.f32.mrf.mxu0
      %v512 = vadd.f32 0.0, %v511
      %v513 = vpop.f32.mrf.mxu0
      %v514 = vpop.f32.mrf.mxu0
      %v515 = vpop.f32.mrf.mxu0
      %516 = vdwg.mxu0
      %v517 = vmul.f32 %v374, 0.35355338
      %v518 = vmul.f32 %v420, 0.35355338
      %v519 = vmul.f32 %v466, 0.35355338
      %v520 = vmul.f32 %v512, 0.35355338
      %vm521 = vcmp.eq.f32.partialorder %v331, 0.0
      %v522 = vsel %vm521, 1, 0
      %vm523 = vcmp.eq.s32.totalorder %v522, 1
      %v524 = vsel %vm523, -10000.0, %v517
      %v525 = vsel %vm523, -10000.0, %v518
      %v526 = vsel %vm523, -10000.0, %v519
      %v527 = vsel %vm523, -10000.0, %v520
      %v528 = vld [vmem:[#allocation2] sm:$0xff]
      %v529 = vld [vmem:[#allocation2 + $0x8] sm:$0xff]
      %v530 = vld [vmem:[#allocation2 + $0x10] sm:$0xff]
      %v531 = vld [vmem:[#allocation2 + $0x18] sm:$0xff]
      %v532 = vsel %vm332, %v524, -inf
      %533 = vmax.xlane.f32.xlu0 %v532
      %v534 = vpop.xlane.xlu0 %533
      %v535 = vsel %vm332, %v525, -inf
      %536 = vmax.xlane.f32.xlu0 %v535
      %v537 = vpop.xlane.xlu0 %536
      %v538 = vsel %vm332, %v526, -inf
      %539 = vmax.xlane.f32.xlu0 %v538
      %v540 = vpop.xlane.xlu0 %539
      %v541 = vsel %vm332, %v527, -inf
      %542 = vmax.xlane.f32.xlu0 %v541
      %v543 = vpop.xlane.xlu0 %542
      %v544 = vmax.f32 %v528, %v534
      %v545 = vmax.f32 %v529, %v537
      %v546 = vmax.f32 %v530, %v540
      %v547 = vmax.f32 %v531, %v543
      %v548 = vsub.f32 %v528, %v544
      %v549 = vsub.f32 %v529, %v545
      %v550 = vsub.f32 %v530, %v546
      %v551 = vsub.f32 %v531, %v547
      %v552 = vmul.f32 %v548, 1.442695
      %v553 = vpow.pop %v552
      %v554 = vmul.f32 %v549, 1.442695
      %v555 = vpow.pop %v554
      %v556 = vmul.f32 %v550, 1.442695
      %v557 = vpow.pop %v556
      %v558 = vmul.f32 %v551, 1.442695
      %v559 = vpow.pop %v558
      %561 = vset.pattern.permute.xlu0 0
      %562 = vperm.xlu0 %561, %v544
      %v563 = vpop.permute.xlu0 %562
      %566 = vset.pattern.permute.xlu0 0
      %567 = vperm.xlu0 %566, %v545
      %v568 = vpop.permute.xlu0 %567
      %571 = vset.pattern.permute.xlu0 0
      %572 = vperm.xlu0 %571, %v546
      %v573 = vpop.permute.xlu0 %572
      %576 = vset.pattern.permute.xlu0 0
      %577 = vperm.xlu0 %576, %v547
      %v578 = vpop.permute.xlu0 %577
      %v580 = vsub.f32 %v524, %v563
      %v581 = vsub.f32 %v525, %v568
      %v582 = vsub.f32 %v526, %v573
      %v583 = vsub.f32 %v527, %v578
      %v584 = vmul.f32 %v580, 1.442695
      %v585 = vpow.pop %v584
      %v586 = vmul.f32 %v581, 1.442695
      %v587 = vpow.pop %v586
      %v588 = vmul.f32 %v582, 1.442695
      %v589 = vpow.pop %v588
      %v590 = vmul.f32 %v583, 1.442695
      %v591 = vpow.pop %v590
      %v592 = vld [vmem:[#allocation3] sm:$0xff]
      %v593 = vld [vmem:[#allocation3 + $0x8] sm:$0xff]
      %v594 = vld [vmem:[#allocation3 + $0x10] sm:$0xff]
      %v595 = vld [vmem:[#allocation3 + $0x18] sm:$0xff]
      %v596 = vmul.f32 %v553, %v592
      %v597 = vmul.f32 %v555, %v593
      %v598 = vmul.f32 %v557, %v594
      %v599 = vmul.f32 %v559, %v595
      %v600 = vsel %vm332, %v585, 0.0
      %601 = vadd.xlane.f32.xlu0 %v600
      %v602 = vpop.xlane.xlu0 %601
      %v603 = vsel %vm332, %v587, 0.0
      %604 = vadd.xlane.f32.xlu0 %v603
      %v605 = vpop.xlane.xlu0 %604
      %v606 = vsel %vm332, %v589, 0.0
      %607 = vadd.xlane.f32.xlu0 %v606
      %v608 = vpop.xlane.xlu0 %607
      %v609 = vsel %vm332, %v591, 0.0
      %610 = vadd.xlane.f32.xlu0 %v609
      %v611 = vpop.xlane.xlu0 %610
      %v612 = vadd.f32 %v596, %v602
      %v613 = vadd.f32 %v597, %v605
      %v614 = vadd.f32 %v598, %v608
      %v615 = vadd.f32 %v599, %v611
      %vm616 = vcmask 7168
      %617 = vst.msk [vmem:[#allocation3] sm:$0xff] %vm616, %v612
      %618 = vst.msk [vmem:[#allocation3 + $0x8] sm:$0xff] %vm616, %v613
      %619 = vst.msk [vmem:[#allocation3 + $0x10] sm:$0xff] %vm616, %v614
      %620 = vst.msk [vmem:[#allocation3 + $0x18] sm:$0xff] %vm616, %v615
      %v621 = vpack.c.bf16 %v585, %v585
      %v622 = vpack.c.bf16 %v587, %v587
      %v623 = vpack.c.bf16 %v589, %v589
      %v624 = vpack.c.bf16 %v591, %v591
      %v626 = vsel %vm332, %v621, 0
      %vm628 = vcmask 1043456
      %v630 = vsel %vm628, %v327, 0
      %632 = vmatprep.subr.bf16.mxu0 0
      %633 = vmatpush1.bf16.msra.mxu0 0
      %634 = vmatprep.subr.bf16.mxu0 0
      %635 = vmatpush1.bf16.msra.mxu0 0
      %636 = vmatprep.subr.bf16.mxu0 0
      %637 = vmatpush1.bf16.msra.mxu0 0
      %638 = vmatprep.subr.bf16.mxu0 0
      %639 = vmatpush1.bf16.msra.mxu0 0
      %640 = vmatprep.subr.bf16.mxu0 0
      %641 = vmatpush1.bf16.msra.mxu0 0
      %642 = vmatprep.subr.bf16.mxu0 0
      %643 = vmatpush1.bf16.msra.mxu0 0
      %644 = vmatprep.subr.bf16.mxu0 0
      %645 = vmatpush1.bf16.msra.mxu0 0
      %646 = vmatprep.subr.bf16.mxu0 0
      %647 = vmatpush1.bf16.msra.mxu0 %v630
      %648 = vmatprep.subr.bf16.mxu0 0
      %649 = vmatpush2.bf16.msra.mxu0 0
      %650 = vmatprep.subr.bf16.mxu0 0
      %651 = vmatpush2.bf16.msra.mxu0 0
      %652 = vmatprep.subr.bf16.mxu0 0
      %653 = vmatpush2.bf16.msra.mxu0 0
      %654 = vmatprep.subr.bf16.mxu0 0
      %655 = vmatpush2.bf16.msra.mxu0 0
      %656 = vmatprep.subr.bf16.mxu0 0
      %657 = vmatpush2.bf16.msra.mxu0 0
      %658 = vmatprep.subr.bf16.mxu0 0
      %659 = vmatpush2.bf16.msra.mxu0 0
      %660 = vmatprep.subr.bf16.mxu0 0
      %661 = vmatpush2.bf16.msra.mxu0 0
      %662 = vmatprep.subr.bf16.mxu0 0
      %663 = vmatpush2.bf16.msra.mxu0 0
      %664 = vmatprep.mubr.bf16.mxu0 0
      %665 = vmatmul.mubr.bf16.gmra.mxu0 %v626
      %v666 = vpop.f32.mrf.mxu0
      %v667 = vadd.f32 0.0, %v666
      %v668 = vpop.f32.mrf.mxu0
      %v669 = vpop.f32.mrf.mxu0
      %v670 = vpop.f32.mrf.mxu0
      %671 = vdwg.mxu0
      %v673 = vsel %vm332, %v622, 0
      %v676 = vsel %vm628, %v328, 0
      %678 = vmatprep.subr.bf16.mxu0 0
      %679 = vmatpush1.bf16.msra.mxu0 0
      %680 = vmatprep.subr.bf16.mxu0 0
      %681 = vmatpush1.bf16.msra.mxu0 0
      %682 = vmatprep.subr.bf16.mxu0 0
      %683 = vmatpush1.bf16.msra.mxu0 0
      %684 = vmatprep.subr.bf16.mxu0 0
      %685 = vmatpush1.bf16.msra.mxu0 0
      %686 = vmatprep.subr.bf16.mxu0 0
      %687 = vmatpush1.bf16.msra.mxu0 0
      %688 = vmatprep.subr.bf16.mxu0 0
      %689 = vmatpush1.bf16.msra.mxu0 0
      %690 = vmatprep.subr.bf16.mxu0 0
      %691 = vmatpush1.bf16.msra.mxu0 0
      %692 = vmatprep.subr.bf16.mxu0 0
      %693 = vmatpush1.bf16.msra.mxu0 %v676
      %694 = vmatprep.subr.bf16.mxu0 0
      %695 = vmatpush2.bf16.msra.mxu0 0
      %696 = vmatprep.subr.bf16.mxu0 0
      %697 = vmatpush2.bf16.msra.mxu0 0
      %698 = vmatprep.subr.bf16.mxu0 0
      %699 = vmatpush2.bf16.msra.mxu0 0
      %700 = vmatprep.subr.bf16.mxu0 0
      %701 = vmatpush2.bf16.msra.mxu0 0
      %702 = vmatprep.subr.bf16.mxu0 0
      %703 = vmatpush2.bf16.msra.mxu0 0
      %704 = vmatprep.subr.bf16.mxu0 0
      %705 = vmatpush2.bf16.msra.mxu0 0
      %706 = vmatprep.subr.bf16.mxu0 0
      %707 = vmatpush2.bf16.msra.mxu0 0
      %708 = vmatprep.subr.bf16.mxu0 0
      %709 = vmatpush2.bf16.msra.mxu0 0
      %710 = vmatprep.mubr.bf16.mxu0 0
      %711 = vmatmul.mubr.bf16.gmra.mxu0 %v673
      %v712 = vpop.f32.mrf.mxu0
      %v713 = vadd.f32 0.0, %v712
      %v714 = vpop.f32.mrf.mxu0
      %v715 = vpop.f32.mrf.mxu0
      %v716 = vpop.f32.mrf.mxu0
      %717 = vdwg.mxu0
      %v719 = vsel %vm332, %v623, 0
      %v722 = vsel %vm628, %v329, 0
      %724 = vmatprep.subr.bf16.mxu0 0
      %725 = vmatpush1.bf16.msra.mxu0 0
      %726 = vmatprep.subr.bf16.mxu0 0
      %727 = vmatpush1.bf16.msra.mxu0 0
      %728 = vmatprep.subr.bf16.mxu0 0
      %729 = vmatpush1.bf16.msra.mxu0 0
      %730 = vmatprep.subr.bf16.mxu0 0
      %731 = vmatpush1.bf16.msra.mxu0 0
      %732 = vmatprep.subr.bf16.mxu0 0
      %733 = vmatpush1.bf16.msra.mxu0 0
      %734 = vmatprep.subr.bf16.mxu0 0
      %735 = vmatpush1.bf16.msra.mxu0 0
      %736 = vmatprep.subr.bf16.mxu0 0
      %737 = vmatpush1.bf16.msra.mxu0 0
      %738 = vmatprep.subr.bf16.mxu0 0
      %739 = vmatpush1.bf16.msra.mxu0 %v722
      %740 = vmatprep.subr.bf16.mxu0 0
      %741 = vmatpush2.bf16.msra.mxu0 0
      %742 = vmatprep.subr.bf16.mxu0 0
      %743 = vmatpush2.bf16.msra.mxu0 0
      %744 = vmatprep.subr.bf16.mxu0 0
      %745 = vmatpush2.bf16.msra.mxu0 0
      %746 = vmatprep.subr.bf16.mxu0 0
      %747 = vmatpush2.bf16.msra.mxu0 0
      %748 = vmatprep.subr.bf16.mxu0 0
      %749 = vmatpush2.bf16.msra.mxu0 0
      %750 = vmatprep.subr.bf16.mxu0 0
      %751 = vmatpush2.bf16.msra.mxu0 0
      %752 = vmatprep.subr.bf16.mxu0 0
      %753 = vmatpush2.bf16.msra.mxu0 0
      %754 = vmatprep.subr.bf16.mxu0 0
      %755 = vmatpush2.bf16.msra.mxu0 0
      %756 = vmatprep.mubr.bf16.mxu0 0
      %757 = vmatmul.mubr.bf16.gmra.mxu0 %v719
      %v758 = vpop.f32.mrf.mxu0
      %v759 = vadd.f32 0.0, %v758
      %v760 = vpop.f32.mrf.mxu0
      %v761 = vpop.f32.mrf.mxu0
      %v762 = vpop.f32.mrf.mxu0
      %763 = vdwg.mxu0
      %v765 = vsel %vm332, %v624, 0
      %v768 = vsel %vm628, %v330, 0
      %770 = vmatprep.subr.bf16.mxu0 0
      %771 = vmatpush1.bf16.msra.mxu0 0
      %772 = vmatprep.subr.bf16.mxu0 0
      %773 = vmatpush1.bf16.msra.mxu0 0
      %774 = vmatprep.subr.bf16.mxu0 0
      %775 = vmatpush1.bf16.msra.mxu0 0
      %776 = vmatprep.subr.bf16.mxu0 0
      %777 = vmatpush1.bf16.msra.mxu0 0
      %778 = vmatprep.subr.bf16.mxu0 0
      %779 = vmatpush1.bf16.msra.mxu0 0
      %780 = vmatprep.subr.bf16.mxu0 0
      %781 = vmatpush1.bf16.msra.mxu0 0
      %782 = vmatprep.subr.bf16.mxu0 0
      %783 = vmatpush1.bf16.msra.mxu0 0
      %784 = vmatprep.subr.bf16.mxu0 0
      %785 = vmatpush1.bf16.msra.mxu0 %v768
      %786 = vmatprep.subr.bf16.mxu0 0
      %787 = vmatpush2.bf16.msra.mxu0 0
      %788 = vmatprep.subr.bf16.mxu0 0
      %789 = vmatpush2.bf16.msra.mxu0 0
      %790 = vmatprep.subr.bf16.mxu0 0
      %791 = vmatpush2.bf16.msra.mxu0 0
      %792 = vmatprep.subr.bf16.mxu0 0
      %793 = vmatpush2.bf16.msra.mxu0 0
      %794 = vmatprep.subr.bf16.mxu0 0
      %795 = vmatpush2.bf16.msra.mxu0 0
      %796 = vmatprep.subr.bf16.mxu0 0
      %797 = vmatpush2.bf16.msra.mxu0 0
      %798 = vmatprep.subr.bf16.mxu0 0
      %799 = vmatpush2.bf16.msra.mxu0 0
      %800 = vmatprep.subr.bf16.mxu0 0
      %801 = vmatpush2.bf16.msra.mxu0 0
      %802 = vmatprep.mubr.bf16.mxu0 0
      %803 = vmatmul.mubr.bf16.gmra.mxu0 %v765
      %v804 = vpop.f32.mrf.mxu0
      %v805 = vadd.f32 0.0, %v804
      %v806 = vpop.f32.mrf.mxu0
      %v807 = vpop.f32.mrf.mxu0
      %v808 = vpop.f32.mrf.mxu0
      %809 = vdwg.mxu0
      %v810 = vld [vmem:[#allocation4] sm:$0xff]
      %v811 = vld [vmem:[#allocation4 + $0x8] sm:$0xff]
      %v812 = vld [vmem:[#allocation4 + $0x10] sm:$0xff]
      %v813 = vld [vmem:[#allocation4 + $0x18] sm:$0xff]
      %815 = vset.pattern.permute.xlu0 0
      %816 = vperm.xlu0 %815, %v553
      %v817 = vpop.permute.xlu0 %816
      %820 = vset.pattern.permute.xlu0 0
      %821 = vperm.xlu0 %820, %v555
      %v822 = vpop.permute.xlu0 %821
      %825 = vset.pattern.permute.xlu0 0
      %826 = vperm.xlu0 %825, %v557
      %v827 = vpop.permute.xlu0 %826
      %830 = vset.pattern.permute.xlu0 0
      %831 = vperm.xlu0 %830, %v559
      %v832 = vpop.permute.xlu0 %831
      %v834 = vmul.f32 %v817, %v810
      %v835 = vmul.f32 %v822, %v811
      %v836 = vmul.f32 %v827, %v812
      %v837 = vmul.f32 %v832, %v813
      %v838 = vadd.f32 %v834, %v667
      %v839 = vadd.f32 %v835, %v713
      %v840 = vadd.f32 %v836, %v759
      %v841 = vadd.f32 %v837, %v805
      %842 = vst.msk [vmem:[#allocation4] sm:$0xff] %vm332, %v838
      %843 = vst.msk [vmem:[#allocation4 + $0x8] sm:$0xff] %vm332, %v839
      %844 = vst.msk [vmem:[#allocation4 + $0x10] sm:$0xff] %vm332, %v840
      %845 = vst.msk [vmem:[#allocation4 + $0x18] sm:$0xff] %vm332, %v841
      %846 = vst.msk [vmem:[#allocation2] sm:$0xff] %vm616, %v544
      %847 = vst.msk [vmem:[#allocation2 + $0x8] sm:$0xff] %vm616, %v545
      %848 = vst.msk [vmem:[#allocation2 + $0x10] sm:$0xff] %vm616, %v546
      %849 = vst.msk [vmem:[#allocation2 + $0x18] sm:$0xff] %vm616, %v547
      // Predicated region
      $region41: #{decoder_forward.18} parent=35 // pred_check
        %p850 = pneg %p301
      $region42: #{decoder_forward.18} parent=35 // pred_check_branch
        %852 = sbr.rel (%p850) target = $region44
      $region43: #{decoder_forward.18} parent=35 // pred_region
        %v853 = vld [vmem:[#allocation4] sm:$0xff]
        %v854 = vld [vmem:[#allocation4 + $0x8] sm:$0xff]
        %v855 = vld [vmem:[#allocation4 + $0x10] sm:$0xff]
        %v856 = vld [vmem:[#allocation4 + $0x18] sm:$0xff]
        %v857 = vld [vmem:[#allocation3] sm:$0xff]
        %v858 = vld [vmem:[#allocation3 + $0x8] sm:$0xff]
        %v859 = vld [vmem:[#allocation3 + $0x10] sm:$0xff]
        %v860 = vld [vmem:[#allocation3 + $0x18] sm:$0xff]
        %v861 = vrcp.pop %v857
        %v862 = vrcp.pop %v858
        %v863 = vrcp.pop %v859
        %v864 = vrcp.pop %v860
        %866 = vset.pattern.permute.xlu0 0
        %867 = vperm.xlu0 %866, %v861
        %v868 = vpop.permute.xlu0 %867
        %871 = vset.pattern.permute.xlu0 0
        %872 = vperm.xlu0 %871, %v862
        %v873 = vpop.permute.xlu0 %872
        %876 = vset.pattern.permute.xlu0 0
        %877 = vperm.xlu0 %876, %v863
        %v878 = vpop.permute.xlu0 %877
        %881 = vset.pattern.permute.xlu0 0
        %882 = vperm.xlu0 %881, %v864
        %v883 = vpop.permute.xlu0 %882
        %v885 = vmul.f32 %v853, %v868
        %v886 = vmul.f32 %v854, %v873
        %v887 = vmul.f32 %v855, %v878
        %v888 = vmul.f32 %v856, %v883
        %v889 = vpack.c.bf16 %v885, %v885
        %v890 = vpack.c.bf16 %v886, %v886
        %v891 = vpack.c.bf16 %v887, %v887
        %v892 = vpack.c.bf16 %v888, %v888
        %vm893 = vcmask 60416
        %894 = vst.msk [vmem:[%s299] sm:$0xf] %vm893, %v889
        %895 = vst.msk [vmem:[%s299 + $0x4] sm:$0xf] %vm893, %v890
        %896 = vst.msk [vmem:[%s299 + $0x8] sm:$0xf] %vm893, %v891
        %897 = vst.msk [vmem:[%s299 + $0xc] sm:$0xf] %vm893, %v892
      $region44: #{decoder_forward.18} parent=35 // pred_fallthru
        _
      %p898 = scmp.lt.s32.totalorder %s19, 1
      %s899 = scalar_select %p898, %s19, 1
      %s900 = smul.addr %s899, 4
      %s901 = smul.addr %s900, 4
      %s902 = scalar_lea.vmem %s4, %s901
      // Predicated region
      $region45: #{decoder_forward.18} parent=35 // pred_check
        %p903 = pneg %p155
      $region46: #{decoder_forward.18} parent=35 // pred_check_branch
        %905 = sbr.rel (%p903) target = $region48
      $region47: #{decoder_forward.18} parent=35 // pred_region
        _
      $region48: #{decoder_forward.18} parent=35 // pred_fallthru
        _
    $region36: #{decoder_forward.18} parent=5 // pred_fallthru
      _
    %p906 = scmp.le.s32.totalorder 2, %s10
    // Predicated region
    $region49: #{decoder_forward.18} parent=5 // pred_check
      %p907 = pneg %p906
    $region50: #{decoder_forward.18} parent=5 // pred_check_branch
      %909 = sbr.rel (%p907) target = $region52
    $region51: #{decoder_forward.18} parent=5 // pred_region
      %s910 = ssub.s32 %s10, 2
      // Predicated region
      $region53: #{decoder_forward.18} parent=51 // pred_check
        %p911 = pneg %p161
      $region54: #{decoder_forward.18} parent=51 // pred_check_branch
        %913 = sbr.rel (%p911) target = $region56
      $region55: #{decoder_forward.18} parent=51 // pred_region
        %p914 = scmp.lt.s32.totalorder %s21, 1
        %s915 = scalar_select %p914, %s21, 1
        %s916 = smul.addr %s915, 4
        %s917 = smul.addr %s916, 4
        %s918 = scalar_lea.vmem %s4, %s917
      $region56: #{decoder_forward.18} parent=51 // pred_fallthru
        _
    $region52: #{decoder_forward.18} parent=5 // pred_fallthru
      _
  $region6: #{decoder_forward.18} parent=0 // loop_footer
    %s14 = sadd.s32 1, %s10
  $region7: #{decoder_forward.18} parent=0 // loop_footer_branch
    %9 = sbr.rel target = $region3
  $region8: #{decoder_forward.18} parent=0 // loop_exit
    _

// kernel: decoder_forward.21
$region0: #{decoder_forward.21}
  #allocation0 [shape = 'u32[]', space=smem, size = 0x4, offset = 0x4, fixed_abs, tag = 'smem constant byte address 0x4 - core index']
  #allocation1 [shape = 'u32[144,128]{1,0:T(1,128)}', space=vmem, size = 0x12000, scoped, tag = 'internal scratch']
  #allocation2 [shape = 'f32[16,64]{1,0:T(8,128)}', space=vmem, size = 0x2000, scoped, tag = 'scratch operand']
  %s0 = inlined_call_operand.vmem [shape: bf16[16,32], index: 0, kind: input, shape index: {}]
  %s1 = inlined_call_operand.vmem [shape: bf16[32,64], index: 1, kind: input, shape index: {}]
  %s2 = inlined_call_operand.vmem [shape: f32[1,64], index: 2, kind: input, shape index: {}]
  %s3 = inlined_call_operand.vmem [shape: bf16[16,64], index: 3, kind: output, shape index: {}]
  %s4 = sld [smem:[#allocation0]]
  $region30: #{decoder_forward.21} parent=0
    _
  %s6 = ssub.s32 1, %s4
  %s7 = scalar_select 0, %s6, %s4
  // Predicated region
  $region2: #{decoder_forward.21} parent=0 // pred_check
    _
  $region3: #{decoder_forward.21} parent=0 // pred_check_branch
    %9 = sbr.rel (0) target = $region5
  $region4: #{decoder_forward.21} parent=0 // pred_region
    _
  $region5: #{decoder_forward.21} parent=0 // pred_fallthru
    _
  // Predicated region
  $region6: #{decoder_forward.21} parent=0 // pred_check
    _
  $region7: #{decoder_forward.21} parent=0 // pred_check_branch
    %11 = sbr.rel (0) target = $region9
  $region8: #{decoder_forward.21} parent=0 // pred_region
    _
  $region9: #{decoder_forward.21} parent=0 // pred_fallthru
    _
  // Predicated region
  $region10: #{decoder_forward.21} parent=0 // pred_check
    _
  $region11: #{decoder_forward.21} parent=0 // pred_check_branch
    %13 = sbr.rel (0) target = $region13
  $region12: #{decoder_forward.21} parent=0 // pred_region
    _
  $region13: #{decoder_forward.21} parent=0 // pred_fallthru
    _
  %p15 = scmp.eq.s32.totalorder 0, 0
  // Predicated region
  $region14: #{decoder_forward.21} parent=0 // pred_check
    %p16 = pneg %p15
  $region15: #{decoder_forward.21} parent=0 // pred_check_branch
    %18 = sbr.rel (%p16) target = $region17
  $region16: #{decoder_forward.21} parent=0 // pred_region
    %vm19 = vcmask 523264
    %20 = vst.msk [vmem:[#allocation2] sm:$0xff] %vm19, 0.0
    %21 = vst.msk [vmem:[#allocation2 + $0x8] sm:$0xff] %vm19, 0.0
  $region17: #{decoder_forward.21} parent=0 // pred_fallthru
    _
  %v22 = vld [vmem:[#allocation2] sm:$0xff]
  %v23 = vld [vmem:[#allocation2 + $0x8] sm:$0xff]
  %v24 = vld [vmem:[%s0] sm:$0xf]
  %v25 = vld [vmem:[%s0 + $0x4] sm:$0xf]
  %v26 = vld [vmem:[%s1] sm:$0xf]
  %v27 = vld [vmem:[%s1 + $0x4] sm:$0xf]
  %v28 = vld [vmem:[%s1 + $0x8] sm:$0xf]
  %v29 = vld [vmem:[%s1 + $0xc] sm:$0xf]
  %v32 = vunpack.c.l.b16 %v24
  %v33 = vunpack.c.l.b16 %v25
  %v34 = vpack.c.b16 %v33, %v32
  %v39 = vunpack.c.l.b16 %v26
  %v40 = vunpack.c.l.b16 %v27
  %v41 = vunpack.c.l.b16 %v28
  %v42 = vunpack.c.l.b16 %v29
  %v43 = vpack.c.b16 %v40, %v39
  %v44 = vpack.c.b16 %v42, %v41
  %vm47 = vcmask 261120
  %v49 = vsel %vm47, %v34, 0
  %51 = vmatprep.subr.bf16.mxu0 0
  %52 = vmatpush1.bf16.msra.mxu0 0
  %53 = vmatprep.subr.bf16.mxu0 0
  %54 = vmatpush1.bf16.msra.mxu0 0
  %55 = vmatprep.subr.bf16.mxu0 0
  %56 = vmatpush1.bf16.msra.mxu0 0
  %57 = vmatprep.subr.bf16.mxu0 0
  %58 = vmatpush1.bf16.msra.mxu0 0
  %59 = vmatprep.subr.bf16.mxu0 0
  %60 = vmatpush1.bf16.msra.mxu0 0
  %61 = vmatprep.subr.bf16.mxu0 0
  %62 = vmatpush1.bf16.msra.mxu0 0
  %63 = vmatprep.subr.bf16.mxu0 0
  %64 = vmatpush1.bf16.msra.mxu0 %v44
  %65 = vmatprep.subr.bf16.mxu0 0
  %66 = vmatpush1.bf16.msra.mxu0 %v43
  %67 = vmatprep.subr.bf16.mxu0 0
  %68 = vmatpush2.bf16.msra.mxu0 0
  %69 = vmatprep.subr.bf16.mxu0 0
  %70 = vmatpush2.bf16.msra.mxu0 0
  %71 = vmatprep.subr.bf16.mxu0 0
  %72 = vmatpush2.bf16.msra.mxu0 0
  %73 = vmatprep.subr.bf16.mxu0 0
  %74 = vmatpush2.bf16.msra.mxu0 0
  %75 = vmatprep.subr.bf16.mxu0 0
  %76 = vmatpush2.bf16.msra.mxu0 0
  %77 = vmatprep.subr.bf16.mxu0 0
  %78 = vmatpush2.bf16.msra.mxu0 0
  %79 = vmatprep.subr.bf16.mxu0 0
  %80 = vmatpush2.bf16.msra.mxu0 0
  %81 = vmatprep.subr.bf16.mxu0 0
  %82 = vmatpush2.bf16.msra.mxu0 0
  %83 = vmatprep.mubr.bf16.mxu0 0
  %84 = vmatmul.mubr.bf16.gmra.mxu0 %v49
  %v85 = vpop.f32.mrf.mxu0
  %v86 = vadd.f32 0.0, %v85
  %v87 = vpop.f32.mrf.mxu0
  %v88 = vpop.f32.mrf.mxu0
  %v89 = vadd.f32 0.0, %v88
  %v90 = vpop.f32.mrf.mxu0
  %91 = vdwg.mxu0
  %v92 = vadd.f32 %v22, %v86
  %v93 = vadd.f32 %v23, %v89
  %vm94 = vcmask 523264
  %95 = vst.msk [vmem:[#allocation2] sm:$0xff] %vm94, %v92
  %96 = vst.msk [vmem:[#allocation2 + $0x8] sm:$0xff] %vm94, %v93
  // Predicated region
  $region18: #{decoder_forward.21} parent=0 // pred_check
    %p97 = pneg %p15
  $region19: #{decoder_forward.21} parent=0 // pred_check_branch
    %99 = sbr.rel (%p97) target = $region21
  $region20: #{decoder_forward.21} parent=0 // pred_region
    %v100 = vld [vmem:[#allocation2] sm:$0xff]
    %v101 = vld [vmem:[#allocation2 + $0x8] sm:$0xff]
    %v102 = vld [vmem:[%s2] sm:$0x1]
    %v104 = vlaneseq
    %v105 = vshrl.u32 %v104, 7
    %v106 = vsub.s32 0, %v105
    %v107 = vrot.slane %v102, %v106
    %v109 = vadd.f32 %v100, %v107
    %v110 = vadd.f32 %v101, %v107
    %v111 = vpack.c.bf16 %v110, %v109
    %v113 = vunpack.c.l.b16 %v111
    %v114 = vunpack.c.h.b16 %v111
    %v115 = vpack.c.b16 %v113, %v113
    %v116 = vpack.c.b16 %v114, %v114
    %vm119 = vcmask 519168
    %120 = vst.msk [vmem:[%s3] sm:$0xf] %vm119, %v115
    %121 = vst.msk [vmem:[%s3 + $0x4] sm:$0xf] %vm119, %v116
  $region21: #{decoder_forward.21} parent=0 // pred_fallthru
    _
  // Predicated region
  $region22: #{decoder_forward.21} parent=0 // pred_check
    _
  $region23: #{decoder_forward.21} parent=0 // pred_check_branch
    %123 = sbr.rel (0) target = $region25
  $region24: #{decoder_forward.21} parent=0 // pred_region
    _
  $region25: #{decoder_forward.21} parent=0 // pred_fallthru
    _
  // Predicated region
  $region26: #{decoder_forward.21} parent=0 // pred_check
    _
  $region27: #{decoder_forward.21} parent=0 // pred_check_branch
    %125 = sbr.rel (0) target = $region29
  $region28: #{decoder_forward.21} parent=0 // pred_region
    _
  $region29: #{decoder_forward.21} parent=0 // pred_fallthru
    _

// kernel: decoder_forward.33
$region0: #{decoder_forward.33}
  #allocation0 [shape = 'u32[]', space=smem, size = 0x4, offset = 0x4, fixed_abs, tag = 'smem constant byte address 0x4 - core index']
  #allocation1 [shape = 'u32[144,128]{1,0:T(1,128)}', space=vmem, size = 0x12000, scoped, tag = 'internal scratch']
  #allocation2 [shape = 'f32[16,64]{1,0:T(8,128)}', space=vmem, size = 0x2000, scoped, tag = 'scratch operand']
  %s0 = inlined_call_operand.vmem [shape: bf16[16,32], index: 0, kind: input, shape index: {}]
  %s1 = inlined_call_operand.vmem [shape: bf16[32,64], index: 1, kind: input, shape index: {}]
  %s2 = inlined_call_operand.vmem [shape: f32[1,64], index: 2, kind: input, shape index: {}]
  %s3 = inlined_call_operand.hbm [shape: f32[16,64], index: 3, kind: output, shape index: {}]
  %s4 = sld [smem:[#allocation0]]
  $region30: #{decoder_forward.33} parent=0
    _
  %s6 = ssub.s32 1, %s4
  %s7 = scalar_select 0, %s6, %s4
  $region1: #{decoder_forward.33} parent=0
    #allocation3 [shape = 'u8[8192]{0}', space=vmem, size = 0x2000, scoped, tag = 'output window, operand 0, single buffered']
    #allocation4 [shape = 's32[1]{0}', space=sflag, size = 0x4, scoped, tag = 'scoped memory for decoder_forward.33']
    %8 = vsyncpa [#allocation4], 0
    // Predicated region
    $region2: #{decoder_forward.33} parent=1 // pred_check
      _
    $region3: #{decoder_forward.33} parent=1 // pred_check_branch
      %10 = sbr.rel (0) target = $region5
    $region4: #{decoder_forward.33} parent=1 // pred_region
      _
    $region5: #{decoder_forward.33} parent=1 // pred_fallthru
      _
    // Predicated region
    $region6: #{decoder_forward.33} parent=1 // pred_check
      _
    $region7: #{decoder_forward.33} parent=1 // pred_check_branch
      %12 = sbr.rel (0) target = $region9
    $region8: #{decoder_forward.33} parent=1 // pred_region
      _
    $region9: #{decoder_forward.33} parent=1 // pred_fallthru
      _
    // Predicated region
    $region10: #{decoder_forward.33} parent=1 // pred_check
      _
    $region11: #{decoder_forward.33} parent=1 // pred_check_branch
      %14 = sbr.rel (0) target = $region13
    $region12: #{decoder_forward.33} parent=1 // pred_region
      _
    $region13: #{decoder_forward.33} parent=1 // pred_fallthru
      _
    %p16 = scmp.eq.s32.totalorder 0, 0
    // Predicated region
    $region14: #{decoder_forward.33} parent=1 // pred_check
      %p17 = pneg %p16
    $region15: #{decoder_forward.33} parent=1 // pred_check_branch
      %19 = sbr.rel (%p17) target = $region17
    $region16: #{decoder_forward.33} parent=1 // pred_region
      %vm20 = vcmask 523264
      %21 = vst.msk [vmem:[#allocation2] sm:$0xff] %vm20, 0.0
      %22 = vst.msk [vmem:[#allocation2 + $0x8] sm:$0xff] %vm20, 0.0
    $region17: #{decoder_forward.33} parent=1 // pred_fallthru
      _
    %v23 = vld [vmem:[#allocation2] sm:$0xff]
    %v24 = vld [vmem:[#allocation2 + $0x8] sm:$0xff]
    %v25 = vld [vmem:[%s0] sm:$0xf]
    %v26 = vld [vmem:[%s0 + $0x4] sm:$0xf]
    %v27 = vld [vmem:[%s1] sm:$0xf]
    %v28 = vld [vmem:[%s1 + $0x4] sm:$0xf]
    %v29 = vld [vmem:[%s1 + $0x8] sm:$0xf]
    %v30 = vld [vmem:[%s1 + $0xc] sm:$0xf]
    %v33 = vunpack.c.l.b16 %v25
    %v34 = vunpack.c.l.b16 %v26
    %v35 = vpack.c.b16 %v34, %v33
    %v40 = vunpack.c.l.b16 %v27
    %v41 = vunpack.c.l.b16 %v28
    %v42 = vunpack.c.l.b16 %v29
    %v43 = vunpack.c.l.b16 %v30
    %v44 = vpack.c.b16 %v41, %v40
    %v45 = vpack.c.b16 %v43, %v42
    %vm48 = vcmask 261120
    %v50 = vsel %vm48, %v35, 0
    %52 = vmatprep.subr.bf16.mxu0 0
    %53 = vmatpush1.bf16.msra.mxu0 0
    %54 = vmatprep.subr.bf16.mxu0 0
    %55 = vmatpush1.bf16.msra.mxu0 0
    %56 = vmatprep.subr.bf16.mxu0 0
    %57 = vmatpush1.bf16.msra.mxu0 0
    %58 = vmatprep.subr.bf16.mxu0 0
    %59 = vmatpush1.bf16.msra.mxu0 0
    %60 = vmatprep.subr.bf16.mxu0 0
    %61 = vmatpush1.bf16.msra.mxu0 0
    %62 = vmatprep.subr.bf16.mxu0 0
    %63 = vmatpush1.bf16.msra.mxu0 0
    %64 = vmatprep.subr.bf16.mxu0 0
    %65 = vmatpush1.bf16.msra.mxu0 %v45
    %66 = vmatprep.subr.bf16.mxu0 0
    %67 = vmatpush1.bf16.msra.mxu0 %v44
    %68 = vmatprep.subr.bf16.mxu0 0
    %69 = vmatpush2.bf16.msra.mxu0 0
    %70 = vmatprep.subr.bf16.mxu0 0
    %71 = vmatpush2.bf16.msra.mxu0 0
    %72 = vmatprep.subr.bf16.mxu0 0
    %73 = vmatpush2.bf16.msra.mxu0 0
    %74 = vmatprep.subr.bf16.mxu0 0
    %75 = vmatpush2.bf16.msra.mxu0 0
    %76 = vmatprep.subr.bf16.mxu0 0
    %77 = vmatpush2.bf16.msra.mxu0 0
    %78 = vmatprep.subr.bf16.mxu0 0
    %79 = vmatpush2.bf16.msra.mxu0 0
    %80 = vmatprep.subr.bf16.mxu0 0
    %81 = vmatpush2.bf16.msra.mxu0 0
    %82 = vmatprep.subr.bf16.mxu0 0
    %83 = vmatpush2.bf16.msra.mxu0 0
    %84 = vmatprep.mubr.bf16.mxu0 0
    %85 = vmatmul.mubr.bf16.gmra.mxu0 %v50
    %v86 = vpop.f32.mrf.mxu0
    %v87 = vadd.f32 0.0, %v86
    %v88 = vpop.f32.mrf.mxu0
    %v89 = vpop.f32.mrf.mxu0
    %v90 = vadd.f32 0.0, %v89
    %v91 = vpop.f32.mrf.mxu0
    %92 = vdwg.mxu0
    %v93 = vadd.f32 %v23, %v87
    %v94 = vadd.f32 %v24, %v90
    %vm95 = vcmask 523264
    %96 = vst.msk [vmem:[#allocation2] sm:$0xff] %vm95, %v93
    %97 = vst.msk [vmem:[#allocation2 + $0x8] sm:$0xff] %vm95, %v94
    // Predicated region
    $region18: #{decoder_forward.33} parent=1 // pred_check
      %p98 = pneg %p16
    $region19: #{decoder_forward.33} parent=1 // pred_check_branch
      %100 = sbr.rel (%p98) target = $region21
    $region20: #{decoder_forward.33} parent=1 // pred_region
      %v101 = vld [vmem:[#allocation2] sm:$0xff]
      %v102 = vld [vmem:[#allocation2 + $0x8] sm:$0xff]
      %v103 = vld [vmem:[%s2] sm:$0x1]
      %v105 = vlaneseq
      %v106 = vshrl.u32 %v105, 7
      %v107 = vsub.s32 0, %v106
      %v108 = vrot.slane %v103, %v107
      %v110 = vadd.f32 %v101, %v108
      %v111 = vadd.f32 %v102, %v108
      %112 = vst.msk [vmem:[#allocation3] sm:$0xff] %vm95, %v110
      %113 = vst.msk [vmem:[#allocation3 + $0x8] sm:$0xff] %vm95, %v111
    $region21: #{decoder_forward.33} parent=1 // pred_fallthru
      _
    // Predicated region
    $region22: #{decoder_forward.33} parent=1 // pred_check
      _
    $region23: #{decoder_forward.33} parent=1 // pred_check_branch
      %115 = sbr.rel (0) target = $region25
    $region24: #{decoder_forward.33} parent=1 // pred_region
      %s117 = ssub.s32 256, 256
      %118 = vsyncadd [#allocation4], %s117
      %s119 = sshll.u32 [#allocation3], 4
      %s120 = int_to_ptr.vmem [resolvable:$true] %s119
      %125 = dma.vmem_to_hbm [thread:$0]  %s120, 256, %s3, [#allocation4], 128, 128, 8
    $region25: #{decoder_forward.33} parent=1 // pred_fallthru
      _
    // Predicated region
    $region26: #{decoder_forward.33} parent=1 // pred_check
      _
    $region27: #{decoder_forward.33} parent=1 // pred_check_branch
      %127 = sbr.rel (0) target = $region29
    $region28: #{decoder_forward.33} parent=1 // pred_region
      %128 = dma.done [#allocation4], 256
    $region29: #{decoder_forward.33} parent=1 // pred_fallthru
      _
    %129 = vsyncpa [#allocation4], 1

// kernel: decoder_forward.24
$region0: #{decoder_forward.24}
  #allocation0 [shape = 'u32[]', space=smem, size = 0x4, offset = 0x4, fixed_abs, tag = 'smem constant byte address 0x4 - core index']
  #allocation1 [shape = 'u32[144,128]{1,0:T(1,128)}', space=vmem, size = 0x12000, scoped, tag = 'internal scratch']
  %s0 = inlined_call_operand.vmem [shape: bf16[16,32], index: 0, kind: input, shape index: {}]
  %s1 = inlined_call_operand.vmem [shape: bf16[32,64], index: 1, kind: input, shape index: {}]
  %s2 = inlined_call_operand.vmem [shape: f32[1,64], index: 2, kind: input, shape index: {}]
  %s3 = inlined_call_operand.vmem [shape: bf16[64,32], index: 3, kind: input, shape index: {}]
  %s4 = inlined_call_operand.vmem [shape: f32[1,32], index: 4, kind: input, shape index: {}]
  %s5 = inlined_call_operand.vmem [shape: f32[1,32], index: 5, kind: input, shape index: {}]
  %s6 = inlined_call_operand.vmem [shape: f32[1,32], index: 6, kind: input, shape index: {}]
  %s7 = inlined_call_operand.vmem [shape: bf16[16,32], index: 7, kind: output, shape index: {}]
  %s8 = sld [smem:[#allocation0]]
  $region38: #{decoder_forward.24} parent=0
    _
  %s10 = ssub.s32 1, %s8
  %s11 = scalar_select 0, %s10, %s8
  // Predicated region
  $region2: #{decoder_forward.24} parent=0 // pred_check
    _
  $region3: #{decoder_forward.24} parent=0 // pred_check_branch
    %13 = sbr.rel (0) target = $region5
  $region4: #{decoder_forward.24} parent=0 // pred_region
    _
  $region5: #{decoder_forward.24} parent=0 // pred_fallthru
    _
  // Predicated region
  $region6: #{decoder_forward.24} parent=0 // pred_check
    _
  $region7: #{decoder_forward.24} parent=0 // pred_check_branch
    %15 = sbr.rel (0) target = $region9
  $region8: #{decoder_forward.24} parent=0 // pred_region
    _
  $region9: #{decoder_forward.24} parent=0 // pred_fallthru
    _
  // Predicated region
  $region10: #{decoder_forward.24} parent=0 // pred_check
    _
  $region11: #{decoder_forward.24} parent=0 // pred_check_branch
    %17 = sbr.rel (0) target = $region13
  $region12: #{decoder_forward.24} parent=0 // pred_region
    _
  $region13: #{decoder_forward.24} parent=0 // pred_fallthru
    _
  // Predicated region
  $region14: #{decoder_forward.24} parent=0 // pred_check
    _
  $region15: #{decoder_forward.24} parent=0 // pred_check_branch
    %19 = sbr.rel (0) target = $region17
  $region16: #{decoder_forward.24} parent=0 // pred_region
    _
  $region17: #{decoder_forward.24} parent=0 // pred_fallthru
    _
  // Predicated region
  $region18: #{decoder_forward.24} parent=0 // pred_check
    _
  $region19: #{decoder_forward.24} parent=0 // pred_check_branch
    %21 = sbr.rel (0) target = $region21
  $region20: #{decoder_forward.24} parent=0 // pred_region
    _
  $region21: #{decoder_forward.24} parent=0 // pred_fallthru
    _
  // Predicated region
  $region22: #{decoder_forward.24} parent=0 // pred_check
    _
  $region23: #{decoder_forward.24} parent=0 // pred_check_branch
    %23 = sbr.rel (0) target = $region25
  $region24: #{decoder_forward.24} parent=0 // pred_region
    _
  $region25: #{decoder_forward.24} parent=0 // pred_fallthru
    _
  // Predicated region
  $region26: #{decoder_forward.24} parent=0 // pred_check
    _
  $region27: #{decoder_forward.24} parent=0 // pred_check_branch
    %25 = sbr.rel (0) target = $region29
  $region28: #{decoder_forward.24} parent=0 // pred_region
    _
  $region29: #{decoder_forward.24} parent=0 // pred_fallthru
    _
  %v27 = vld [vmem:[%s0] sm:$0xf]
  %v28 = vld [vmem:[%s0 + $0x4] sm:$0xf]
  %v29 = vld [vmem:[%s1] sm:$0xf]
  %v30 = vld [vmem:[%s1 + $0x4] sm:$0xf]
  %v31 = vld [vmem:[%s1 + $0x8] sm:$0xf]
  %v32 = vld [vmem:[%s1 + $0xc] sm:$0xf]
  %v33 = vld [vmem:[%s2] sm:$0x1]
  %v35 = vlaneseq
  %v36 = vshrl.u32 %v35, 7
  %v37 = vsub.s32 0, %v36
  %v38 = vrot.slane %v33, %v37
  %v42 = vunpack.c.l.b16 %v27
  %v43 = vunpack.c.l.b16 %v28
  %v44 = vpack.c.b16 %v43, %v42
  %v49 = vunpack.c.l.b16 %v29
  %v50 = vunpack.c.l.b16 %v30
  %v51 = vunpack.c.l.b16 %v31
  %v52 = vunpack.c.l.b16 %v32
  %v53 = vpack.c.b16 %v50, %v49
  %v54 = vpack.c.b16 %v52, %v51
  %vm57 = vcmask 261120
  %v59 = vsel %vm57, %v44, 0
  %61 = vmatprep.subr.bf16.mxu0 0
  %62 = vmatpush1.bf16.msra.mxu0 0
  %63 = vmatprep.subr.bf16.mxu0 0
  %64 = vmatpush1.bf16.msra.mxu0 0
  %65 = vmatprep.subr.bf16.mxu0 0
  %66 = vmatpush1.bf16.msra.mxu0 0
  %67 = vmatprep.subr.bf16.mxu0 0
  %68 = vmatpush1.bf16.msra.mxu0 0
  %69 = vmatprep.subr.bf16.mxu0 0
  %70 = vmatpush1.bf16.msra.mxu0 0
  %71 = vmatprep.subr.bf16.mxu0 0
  %72 = vmatpush1.bf16.msra.mxu0 0
  %73 = vmatprep.subr.bf16.mxu0 0
  %74 = vmatpush1.bf16.msra.mxu0 %v54
  %75 = vmatprep.subr.bf16.mxu0 0
  %76 = vmatpush1.bf16.msra.mxu0 %v53
  %77 = vmatprep.subr.bf16.mxu0 0
  %78 = vmatpush2.bf16.msra.mxu0 0
  %79 = vmatprep.subr.bf16.mxu0 0
  %80 = vmatpush2.bf16.msra.mxu0 0
  %81 = vmatprep.subr.bf16.mxu0 0
  %82 = vmatpush2.bf16.msra.mxu0 0
  %83 = vmatprep.subr.bf16.mxu0 0
  %84 = vmatpush2.bf16.msra.mxu0 0
  %85 = vmatprep.subr.bf16.mxu0 0
  %86 = vmatpush2.bf16.msra.mxu0 0
  %87 = vmatprep.subr.bf16.mxu0 0
  %88 = vmatpush2.bf16.msra.mxu0 0
  %89 = vmatprep.subr.bf16.mxu0 0
  %90 = vmatpush2.bf16.msra.mxu0 0
  %91 = vmatprep.subr.bf16.mxu0 0
  %92 = vmatpush2.bf16.msra.mxu0 0
  %93 = vmatprep.mubr.bf16.mxu0 0
  %94 = vmatmul.mubr.bf16.gmra.mxu0 %v59
  %v95 = vpop.f32.mrf.mxu0
  %v96 = vadd.f32 %v38, %v95
  %v97 = vpop.f32.mrf.mxu0
  %v98 = vpop.f32.mrf.mxu0
  %v99 = vadd.f32 %v38, %v98
  %v100 = vpop.f32.mrf.mxu0
  %101 = vdwg.mxu0
  %v102 = vmax.f32 %v96, 0.0
  %v103 = vmax.f32 %v99, 0.0
  %v104 = vpack.c.bf16 %v103, %v102
  %v105 = vld [vmem:[%s3] sm:$0xf]
  %v106 = vld [vmem:[%s3 + $0x4] sm:$0xf]
  %v107 = vld [vmem:[%s3 + $0x8] sm:$0xf]
  %v108 = vld [vmem:[%s3 + $0xc] sm:$0xf]
  %v109 = vld [vmem:[%s3 + $0x10] sm:$0xf]
  %v110 = vld [vmem:[%s3 + $0x14] sm:$0xf]
  %v111 = vld [vmem:[%s3 + $0x18] sm:$0xf]
  %v112 = vld [vmem:[%s3 + $0x1c] sm:$0xf]
  %v113 = vld [vmem:[%s4] sm:$0x1]
  %v115 = vlaneseq
  %v116 = vshrl.u32 %v115, 7
  %v117 = vsub.s32 0, %v116
  %v118 = vrot.slane %v113, %v117
  %v128 = vunpack.c.l.b16 %v105
  %v129 = vunpack.c.l.b16 %v106
  %v130 = vunpack.c.l.b16 %v107
  %v131 = vunpack.c.l.b16 %v108
  %v132 = vunpack.c.l.b16 %v109
  %v133 = vunpack.c.l.b16 %v110
  %v134 = vunpack.c.l.b16 %v111
  %v135 = vunpack.c.l.b16 %v112
  %v136 = vpack.c.b16 %v129, %v128
  %v137 = vpack.c.b16 %v131, %v130
  %v138 = vpack.c.b16 %v133, %v132
  %v139 = vpack.c.b16 %v135, %v134
  %vm144 = vcmask 523264
  %v146 = vsel %vm144, %v104, 0
  %148 = vmatprep.subr.bf16.mxu0 0
  %149 = vmatpush1.bf16.msra.mxu0 0
  %150 = vmatprep.subr.bf16.mxu0 0
  %151 = vmatpush1.bf16.msra.mxu0 0
  %152 = vmatprep.subr.bf16.mxu0 0
  %153 = vmatpush1.bf16.msra.mxu0 0
  %154 = vmatprep.subr.bf16.mxu0 0
  %155 = vmatpush1.bf16.msra.mxu0 0
  %156 = vmatprep.subr.bf16.mxu0 0
  %157 = vmatpush1.bf16.msra.mxu0 %v139
  %158 = vmatprep.subr.bf16.mxu0 0
  %159 = vmatpush1.bf16.msra.mxu0 %v138
  %160 = vmatprep.subr.bf16.mxu0 0
  %161 = vmatpush1.bf16.msra.mxu0 %v137
  %162 = vmatprep.subr.bf16.mxu0 0
  %163 = vmatpush1.bf16.msra.mxu0 %v136
  %164 = vmatprep.subr.bf16.mxu0 0
  %165 = vmatpush2.bf16.msra.mxu0 0
  %166 = vmatprep.subr.bf16.mxu0 0
  %167 = vmatpush2.bf16.msra.mxu0 0
  %168 = vmatprep.subr.bf16.mxu0 0
  %169 = vmatpush2.bf16.msra.mxu0 0
  %170 = vmatprep.subr.bf16.mxu0 0
  %171 = vmatpush2.bf16.msra.mxu0 0
  %172 = vmatprep.subr.bf16.mxu0 0
  %173 = vmatpush2.bf16.msra.mxu0 0
  %174 = vmatprep.subr.bf16.mxu0 0
  %175 = vmatpush2.bf16.msra.mxu0 0
  %176 = vmatprep.subr.bf16.mxu0 0
  %177 = vmatpush2.bf16.msra.mxu0 0
  %178 = vmatprep.subr.bf16.mxu0 0
  %179 = vmatpush2.bf16.msra.mxu0 0
  %180 = vmatprep.mubr.bf16.mxu0 0
  %181 = vmatmul.mubr.bf16.gmra.mxu0 %v146
  %v182 = vpop.f32.mrf.mxu0
  %v183 = vadd.f32 %v118, %v182
  %v184 = vpop.f32.mrf.mxu0
  %v185 = vpop.f32.mrf.mxu0
  %v186 = vadd.f32 %v118, %v185
  %v187 = vpop.f32.mrf.mxu0
  %188 = vdwg.mxu0
  %v189 = vunpack.c.l.bf16 %v27
  %v190 = vunpack.c.l.bf16 %v28
  %v191 = vadd.f32 %v183, %v189
  %v192 = vadd.f32 %v186, %v190
  %v193 = vsel %vm57, %v191, 0.0
  %194 = vadd.xlane.f32.xlu0 %v193
  %v195 = vpop.xlane.xlu0 %194
  %v196 = vsel %vm57, %v192, 0.0
  %197 = vadd.xlane.f32.xlu0 %v196
  %v198 = vpop.xlane.xlu0 %197
  %v199 = vrcp.pop 32.0
  %v200 = vmul.f32 %v195, %v199
  %v201 = vmul.f32 %v198, %v199
  %v202 = vsub.f32 %v191, %v200
  %v203 = vsub.f32 %v192, %v201
  %v204 = vmul.f32 %v202, %v202
  %v205 = vmul.f32 %v203, %v203
  %v206 = vsel %vm57, %v204, 0.0
  %207 = vadd.xlane.f32.xlu0 %v206
  %v208 = vpop.xlane.xlu0 %207
  %v209 = vsel %vm57, %v205, 0.0
  %210 = vadd.xlane.f32.xlu0 %v209
  %v211 = vpop.xlane.xlu0 %210
  %v212 = vmul.f32 %v208, %v199
  %v213 = vmul.f32 %v211, %v199
  %v214 = vadd.f32 %v212, 1e-12
  %v215 = vadd.f32 %v213, 1e-12
  %v216 = vrsqrt.pop %v214
  %v217 = vrsqrt.pop %v215
  %v218 = vmul.f32 %v202, %v216
  %v219 = vmul.f32 %v203, %v217
  %v220 = vld [vmem:[%s5] sm:$0x1]
  %v222 = vlaneseq
  %v223 = vshrl.u32 %v222, 7
  %v224 = vsub.s32 0, %v223
  %v225 = vrot.slane %v220, %v224
  %v227 = vmul.f32 %v218, %v225
  %v228 = vmul.f32 %v219, %v225
  %v229 = vld [vmem:[%s6] sm:$0x1]
  %v231 = vlaneseq
  %v232 = vshrl.u32 %v231, 7
  %v233 = vsub.s32 0, %v232
  %v234 = vrot.slane %v229, %v233
  %v236 = vadd.f32 %v227, %v234
  %v237 = vadd.f32 %v228, %v234
  %v238 = vpack.c.bf16 %v237, %v236
  %v240 = vunpack.c.l.b16 %v238
  %v241 = vunpack.c.h.b16 %v238
  %v242 = vpack.c.b16 %v240, %v240
  %v243 = vpack.c.b16 %v241, %v241
  %vm246 = vcmask 257024
  %247 = vst.msk [vmem:[%s7] sm:$0xf] %vm246, %v242
  %248 = vst.msk [vmem:[%s7 + $0x4] sm:$0xf] %vm246, %v243
  // Predicated region
  $region30: #{decoder_forward.24} parent=0 // pred_check
    _
  $region31: #{decoder_forward.24} parent=0 // pred_check_branch
    %250 = sbr.rel (0) target = $region33
  $region32: #{decoder_forward.24} parent=0 // pred_region
    _
  $region33: #{decoder_forward.24} parent=0 // pred_fallthru
    _
  // Predicated region
  $region34: #{decoder_forward.24} parent=0 // pred_check
    _
  $region35: #{decoder_forward.24} parent=0 // pred_check_branch
    %252 = sbr.rel (0) target = $region37
  $region36: #{decoder_forward.24} parent=0 // pred_region
    _
  $region37: #{decoder_forward.24} parent=0 // pred_fallthru
    _

</llo_original>
